<compile_context>
chip_gen: v5e
topology: v5e:2x2
jax: 0.10.0
libtpu: 0.0.40
codegen_flags: <defaults>
</compile_context>

<pallas_src>
import jax
import jax.numpy as jnp
import numpy as np
from jax import lax
from jax.experimental import pallas as pl
from jax.experimental.pallas import tpu as pltpu

# ---- Mamba hyperparameters (match the PyTorch module defaults) ----
D_MODEL = 16
D_STATE = 16
D_CONV = 4
EXPAND = 2
D_INNER = EXPAND * D_MODEL            # 32
DT_RANK = max(1, -(-D_MODEL // 16))   # ceil(d_model / 16) = 1

B_TILE = 8                            # batch elems packed along lanes per grid step
PACK_W = B_TILE * D_INNER             # 256 lanes for the d_inner-sized activations
PACK_M = B_TILE * D_MODEL             # 128 lanes (lane-dense) for d_model activations


def _silu(x):
    return x / (1.0 + jnp.exp(-x))            # x * sigmoid(x), exp/div only


def _softplus(x):
    return jnp.where(x > 20.0, x,
                     jnp.log(1.0 + jnp.exp(jnp.minimum(x, 20.0))))


def _ru(x, m):
    return ((x + m - 1) // m) * m


# --------------------------------------------------------------------------
# Kernel 1: the full Mamba block for one packed batch group.
# --------------------------------------------------------------------------
def mamba_block_kernel(x_ref,       # (1, L, PACK_M) bf16   packed embeddings
                       wu_ref,      # (PACK_M, PACK_W) bf16 block-diag in_proj (u)
                       wz_ref,      # (PACK_M, PACK_W) bf16 block-diag in_proj (z)
                       wconv_ref,   # (d_conv, PACK_W) f32  depthwise conv taps
                       bconv_ref,   # (1, PACK_W) f32
                       wdelta_ref,  # (PACK_W, PACK_W) bf16 fused x_proj_dt @ dt_proj
                       bdt_ref,     # (1, PACK_W) f32
                       wbt_ref,     # (d_state, PACK_W) f32  W_B^T tiled over batch
                       wct_ref,     # (d_state, PACK_W) f32  W_C^T tiled over batch
                       p32_ref,     # (PACK_W, PACK_W) f32  kron(I_B, ones(32,32))
                       a_ref,       # (d_state, PACK_W) f32  A^T tiled over batch
                       dvec_ref,    # (1, PACK_W) f32
                       wout_ref,    # (PACK_W, PACK_M) bf16 block-diag out_proj
                       out_ref):    # (1, L, PACK_M) bf16
    f32 = jnp.float32
    bf16 = jnp.bfloat16
    x = x_ref[0]                                                  # (L, 128) bf16
    L = x.shape[0]

    # ---- in_proj (block-diag weight, bf16 MXU, f32 accumulate) ----
    u = jnp.dot(x, wu_ref[...], preferred_element_type=f32)      # (L, 256)
    z = jnp.dot(x, wz_ref[...], preferred_element_type=f32)      # (L, 256)

    # ---- causal depthwise conv along seq (static slices of a zero-padded copy) ----
    # NOTE: could run on the XLU via pltpu.roll(axis=0) + iota mask; kept as padded
    # static slices -- identical math, negligible cost at this tile size.
    wconv = wconv_ref[...]
    u_pad = jnp.concatenate(
        [jnp.zeros((D_CONV - 1, PACK_W), f32), u], axis=0)       # (L+3, 256)
    conv = jnp.broadcast_to(bconv_ref[...], (L, PACK_W))
    for k in range(D_CONV):
        conv = conv + wconv[k:k + 1, :] * u_pad[k:k + L, :]
    u_act = _silu(conv)                                          # (L, 256)

    # ---- fused x_proj(dt) -> dt_proj (dt_rank == 1) ----
    delta = _softplus(
        jnp.dot(u_act.astype(bf16), wdelta_ref[...], preferred_element_type=f32)
        + bdt_ref[...])                                          # (L, 256)

    # ---- B/C projections with per-batch sum + broadcast (p32 block-diag ones) ----
    # b_bcast[t, s, (b,i)] = sum_{i'} u_act[t,(b,i')] * W_B[i',s]  (same for C);
    # built directly as 3-D broadcasts (no E/E^T replication matrices).
    u3 = u_act[:, None, :]                                       # (L, 1, 256)
    prod_b = (u3 * wbt_ref[...][None]).reshape(L * D_STATE, PACK_W)
    prod_c = (u3 * wct_ref[...][None]).reshape(L * D_STATE, PACK_W)
    p32 = p32_ref[...]
    b_bcast = jnp.dot(prod_b, p32,
                      preferred_element_type=f32).reshape(L, D_STATE, PACK_W)
    c_bcast = jnp.dot(prod_c, p32,
                      preferred_element_type=f32).reshape(L, D_STATE, PACK_W)

    # ---- hoisted scan precompute (one big EUP exp, everything vectorized) ----
    dA = jnp.exp(delta[:, None, :] * a_ref[...][None])           # (L, 16, 256)
    dbu = (delta * u_act)[:, None, :] * b_bcast                  # (L, 16, 256)

    # ---- selective scan: pure VPU FMA recurrence kept in registers ----
    # TODO(synk): for large L, replace with a chunked prefix-scan + sequence-chunk
    # grid axis carrying h, and use partial unroll instead of a full static unroll.
    h = jnp.zeros((D_STATE, PACK_W), f32)
    ys = []
    for t in range(L):                          # static L -> fully unrolled
        h = dA[t] * h + dbu[t]
        ys.append(jnp.sum(h * c_bcast[t], axis=0, keepdims=True))   # (1, 256)
    y = jnp.concatenate(ys, axis=0)                                  # (L, 256)

    # ---- skip + gate + out_proj (bf16 MXU), lane-dense bf16 store ----
    y = y + dvec_ref[...] * u_act
    y = y * _silu(z)
    out_ref[0] = jnp.dot(y.astype(bf16), wout_ref[...],
                         preferred_element_type=f32).astype(out_ref.dtype)


# --------------------------------------------------------------------------
# Kernel 2: lm_head, row-tiled x vocab-tiled (bf16 inputs, f32 accumulate).
# --------------------------------------------------------------------------
def lm_head_kernel(h_ref, w_ref, b_ref, o_ref):
    o_ref[...] = (jnp.dot(h_ref[...], w_ref[...],
                          preferred_element_type=jnp.float32) + b_ref[...])


def _block_diag(w, n):
    return jnp.kron(jnp.eye(n, dtype=w.dtype), w)


@jax.jit
def mamba_language_model(input_ids, params):
    f32 = jnp.float32
    bf16 = jnp.bfloat16
    emb = params["embedding"]
    bsz, L = input_ids.shape
    vocab = emb.shape[0]

    # TODO(synk): embedding row gather stays in XLA; could move in-kernel via
    # PrefetchScalarGridSpec scalar-prefetched ids + per-row DMA.
    x = emb[input_ids].astype(f32)                     # (B, L, d_model)

    # ---- pack B_TILE batch elements along the lane axis ----
    n_grp = -(-bsz // B_TILE)
    b_pad = n_grp * B_TILE - bsz
    if b_pad:
        x = jnp.pad(x, ((0, b_pad), (0, 0), (0, 0)))
    x_g = (x.reshape(n_grp, B_TILE, L, D_MODEL)
            .transpose(0, 2, 1, 3)
            .reshape(n_grp, L, PACK_M)
            .astype(bf16))

    # ---- wrapper-side weight packing (tiny) ----
    w_in_T = params["w_in_T"]                          # (d_model, 2*d_inner)
    wu = _block_diag(w_in_T[:, :D_INNER], B_TILE).astype(bf16)     # (128, 256)
    wz = _block_diag(w_in_T[:, D_INNER:], B_TILE).astype(bf16)     # (128, 256)
    wconv = jnp.tile(params["w_conv"], (1, B_TILE))                # (4, 256)
    bconv = jnp.tile(params["b_conv"], (1, B_TILE))                # (1, 256)

    w_x = params["w_xproj_T"]                          # (d_inner, dt_rank+2*d_state)
    w_b = w_x[:, DT_RANK:DT_RANK + D_STATE]            # (d_inner, d_state)
    w_c = w_x[:, DT_RANK + D_STATE:]                   # (d_inner, d_state)
    w_delta = w_x[:, :DT_RANK] @ params["w_dt_T"]      # fused (d_inner, d_inner)
    wdelta = _block_diag(w_delta, B_TILE).astype(bf16)             # (256, 256)
    bdt = jnp.tile(params["b_dt"], (1, B_TILE))                    # (1, 256)

    wbt = jnp.tile(w_b.T, (1, B_TILE))                             # (16, 256)
    wct = jnp.tile(w_c.T, (1, B_TILE))                             # (16, 256)
    p32 = jnp.kron(jnp.eye(B_TILE, dtype=f32),
                   jnp.ones((D_INNER, D_INNER), f32))              # (256, 256)
    afull = jnp.tile((-jnp.exp(params["A_log"])).T, (1, B_TILE))   # (16, 256)
    dvec = jnp.tile(params["D"], (1, B_TILE))                      # (1, 256)
    wout = _block_diag(params["w_out_T"], B_TILE).astype(bf16)     # (256, 128)

    weights = [wu, wz, wconv, bconv, wdelta, bdt, wbt, wct, p32,
               afull, dvec, wout]

    # NOTE(v7x): with tiny batches B_TILE=8 collapses n_grp to 1 and one TC idles on
    # this kernel; lane density wins at these shapes, lm_head tiles still parallelize.
    grid_spec = pltpu.PrefetchScalarGridSpec(
        num_scalar_prefetch=0,
        grid=(n_grp,),
        in_specs=[pl.BlockSpec((1, L, PACK_M), lambda g: (g, 0, 0))]
                 + [pl.BlockSpec(w.shape, lambda g: (0, 0)) for w in weights],
        out_specs=pl.BlockSpec((1, L, PACK_M), lambda g: (g, 0, 0)),
    )
    hidden_g = pl.pallas_call(
        mamba_block_kernel,
        out_shape=jax.ShapeDtypeStruct((n_grp, L, PACK_M), bf16),
        grid_spec=grid_spec,
        compiler_params=pltpu.CompilerParams(
            dimension_semantics=("parallel",)),        # batch groups are independent
    )(x_g, *weights)

    # ---- un-pack (tiny d_model-wide tensor) to bf16 rows in (b, t) order ----
    hid_rows = (hidden_g.reshape(n_grp, L, B_TILE, D_MODEL)
                        .transpose(0, 2, 1, 3)
                        .reshape(n_grp * B_TILE, L, D_MODEL)[:bsz]
                        .reshape(bsz * L, D_MODEL))

    # ---- lm_head: row-tiled x vocab-tiled, zero-padded to tile multiples ----
    rows = bsz * L
    r_tile = min(512, _ru(rows, 8))
    rows_pad = _ru(rows, r_tile)
    # v7x: v_tile <= 8192 with r_tile <= 512 keeps the double-buffered working set
    # under the 32 MiB scoped-VMEM default; v5e/v6e could push v_tile to 16384.
    v_tile = min(8192, _ru(vocab, 128))
    vocab_pad = _ru(vocab, v_tile)

    if rows_pad != rows:
        hid_rows = jnp.pad(hid_rows, ((0, rows_pad - rows), (0, 0)))
    w_lm = params["w_lm_T"].astype(bf16)               # (d_model, vocab)
    b_lm = params["b_lm"]                              # (1, vocab) f32
    if vocab_pad != vocab:
        w_lm = jnp.pad(w_lm, ((0, 0), (0, vocab_pad - vocab)))
        b_lm = jnp.pad(b_lm, ((0, 0), (0, vocab_pad - vocab)))

    logits_rows = pl.pallas_call(
        lm_head_kernel,
        out_shape=jax.ShapeDtypeStruct((rows_pad, vocab_pad), jnp.float32),
        grid_spec=pltpu.PrefetchScalarGridSpec(
            num_scalar_prefetch=0,
            grid=(rows_pad // r_tile, vocab_pad // v_tile),
            in_specs=[pl.BlockSpec((r_tile, D_MODEL), lambda r, v: (r, 0)),
                      pl.BlockSpec((D_MODEL, v_tile), lambda r, v: (0, v)),
                      pl.BlockSpec((1, v_tile), lambda r, v: (0, v))],
            out_specs=pl.BlockSpec((r_tile, v_tile), lambda r, v: (r, v)),
        ),
        compiler_params=pltpu.CompilerParams(
            dimension_semantics=("parallel", "parallel")),
    )(hid_rows, w_lm, b_lm)

    return logits_rows[:rows, :vocab].reshape(bsz, L, vocab)


def init_params(key, vocab):
    ks = jax.random.split(key, 9)
    emb = 0.2 * jax.random.normal(ks[0], (vocab, D_MODEL), jnp.float32)
    w_in = 0.3 * jax.random.normal(ks[1], (2 * D_INNER, D_MODEL), jnp.float32)
    w_conv = 0.3 * jax.random.normal(ks[2], (D_INNER, 1, D_CONV), jnp.float32)
    b_conv = 0.1 * jax.random.normal(ks[3], (D_INNER,), jnp.float32)
    w_xproj = 0.3 * jax.random.normal(ks[4], (DT_RANK + 2 * D_STATE, D_INNER),
                                      jnp.float32)
    w_dt = jax.random.normal(ks[5], (D_INNER, DT_RANK), jnp.float32)
    b_dt = jnp.full((D_INNER,), jnp.log(jnp.expm1(0.1)), jnp.float32)
    A = jnp.broadcast_to(jnp.arange(1, D_STATE + 1, dtype=jnp.float32),
                         (D_INNER, D_STATE))
    w_out = 0.3 * jax.random.normal(ks[6], (D_MODEL, D_INNER), jnp.float32)
    w_lm = 0.5 * jax.random.normal(ks[7], (vocab, D_MODEL), jnp.float32)
    b_lm = 0.1 * jax.random.normal(ks[8], (vocab,), jnp.float32)
    return {
        "embedding": emb,
        "w_in_T": w_in.T,                          # (d_model, 2*d_inner)
        "w_conv": jnp.transpose(w_conv[:, 0, :]),  # (d_conv, d_inner), tap k -> u[t-3+k]
        "b_conv": b_conv.reshape(1, D_INNER),
        "w_xproj_T": w_xproj.T,                    # (d_inner, dt_rank + 2*d_state)
        "w_dt_T": w_dt.T,                          # (dt_rank, d_inner)
        "b_dt": b_dt.reshape(1, D_INNER),
        "A_log": jnp.log(A),                       # (d_inner, d_state)
        "D": jnp.ones((1, D_INNER), jnp.float32),
        "w_out_T": w_out.T,                        # (d_inner, d_model)
        "w_lm_T": w_lm.T,                          # (d_model, vocab)
        "b_lm": b_lm.reshape(1, vocab),
    }


def reference_forward(input_ids, p):
    """Pure-JAX f32 reference mirroring the PyTorch forward semantics (unfused)."""
    x = p["embedding"][input_ids]                          # (B, L, d_model)
    xz = x @ p["w_in_T"]
    u, z = xz[..., :D_INNER], xz[..., D_INNER:]
    L = u.shape[1]
    u_pad = jnp.pad(u, ((0, 0), (D_CONV - 1, 0), (0, 0)))
    conv = p["b_conv"][None]
    for k in range(D_CONV):
        conv = conv + p["w_conv"][k] * u_pad[:, k:k + L, :]
    u_act = _silu(conv)
    x_dbl = u_act @ p["w_xproj_T"]
    dt_in = x_dbl[..., :DT_RANK]
    Bm = x_dbl[..., DT_RANK:DT_RANK + D_STATE]
    Cm = x_dbl[..., DT_RANK + D_STATE:]
    delta = _softplus(dt_in @ p["w_dt_T"] + p["b_dt"][None])
    A = -jnp.exp(p["A_log"])                               # (d_inner, d_state)
    Dv = p["D"][0]
    bsz = u.shape[0]
    h = jnp.zeros((bsz, D_INNER, D_STATE), jnp.float32)
    ys = []
    for t in range(L):
        dA = jnp.exp(delta[:, t, :, None] * A[None])
        dBu = delta[:, t, :, None] * Bm[:, t, None, :] * u_act[:, t, :, None]
        h = dA * h + dBu
        y_t = jnp.sum(h * Cm[:, t, None, :], axis=-1) + Dv * u_act[:, t, :]
        ys.append(y_t)
    y = jnp.stack(ys, axis=1) * _silu(z)
    out = y @ p["w_out_T"]
    return out @ p["w_lm_T"] + p["b_lm"][None]


if __name__ == "__main__":
    VOCAB = 256      # synthetic vocab (klue/bert-base tokenizer not loaded here)
    B, L = 6, 8      # B=6 exercises zero-padding of the packed batch group

    key = jax.random.PRNGKey(0)
    pkey, ikey = jax.random.split(key)
    params = init_params(pkey, VOCAB)
    input_ids = jax.random.randint(ikey, (B, L), 0, VOCAB, dtype=jnp.int32)

    logits = jax.block_until_ready(mamba_language_model(input_ids, params))
    assert logits.shape == (B, L, VOCAB)

    ref = reference_forward(input_ids, params)
    np.testing.assert_allclose(np.asarray(logits), np.asarray(ref),
                               atol=2e-2, rtol=2e-2)   # bf16 MXU path vs f32 reference
    print("KERNEL_OK")
</pallas_src>

<mosaic_0001>
module attributes {stable_mosaic.version = 11 : i64} {
  func.func @lm_head_kernel(%arg0: i32, %arg1: i32, %arg2: memref<48x16xbf16, #tpu.memory_space<vmem>>, %arg3: memref<16x256xbf16, #tpu.memory_space<vmem>>, %arg4: memref<1x256xf32, #tpu.memory_space<vmem>>, %arg5: memref<48x256xf32, #tpu.memory_space<vmem>>) attributes {dimension_semantics = [#tpu.dimension_semantics<parallel>, #tpu.dimension_semantics<parallel>], iteration_bounds = array<i64: 1, 1>, scalar_prefetch = 0 : i64, scratch_operands = 0 : i64, tpu.core_type = #tpu.core_type<tc>, window_params = [{transform_indices = @transform_0, window_bounds = array<i64: 48, 16>}, {transform_indices = @transform_1, window_bounds = array<i64: 16, 256>}, {transform_indices = @transform_2, window_bounds = array<i64: 1, 256>}, {transform_indices = @transform_3, window_bounds = array<i64: 48, 256>}]} {
    %c0 = arith.constant 0 : index
    %c0_0 = arith.constant 0 : index
    %0 = vector.load %arg2[%c0, %c0_0] : memref<48x16xbf16, #tpu.memory_space<vmem>>, vector<48x16xbf16>
    %c0_1 = arith.constant 0 : index
    %c0_2 = arith.constant 0 : index
    %1 = vector.load %arg3[%c0_1, %c0_2] : memref<16x256xbf16, #tpu.memory_space<vmem>>, vector<16x256xbf16>
    %cst = arith.constant dense<0.000000e+00> : vector<48x256xf32>
    %2 = tpu.matmul %0, %1, %cst {dimension_numbers = #tpu.dot_dimension_numbers<[1], [0], [0], [1], [0, 0, 1, 1], [], []>} : vector<48x16xbf16>, vector<16x256xbf16>, vector<48x256xf32> -> vector<48x256xf32>
    %c0_3 = arith.constant 0 : index
    %c0_4 = arith.constant 0 : index
    %3 = vector.load %arg4[%c0_3, %c0_4] : memref<1x256xf32, #tpu.memory_space<vmem>>, vector<1x256xf32>
    %4 = vector.broadcast %3 : vector<1x256xf32> to vector<48x256xf32>
    %5 = arith.addf %2, %4 : vector<48x256xf32>
    %c0_5 = arith.constant 0 : index
    %c0_6 = arith.constant 0 : index
    %6 = vector.load %arg5[%c0_5, %c0_6] : memref<48x256xf32, #tpu.memory_space<vmem>>, vector<48x256xf32>
    tpu.vector_store %arg5[%c0_5, %c0_6], %5 {strides = array<i32>} : memref<48x256xf32, #tpu.memory_space<vmem>>, vector<48x256xf32>,
    return
  }
  func.func @transform_0(%arg0: i32, %arg1: i32) -> (i32, i32) {
    %c0_i32 = arith.constant 0 : i32
    %c0_i32_0 = arith.constant 0 : i32
    return %arg0, %c0_i32 : i32, i32
  }
  func.func @transform_1(%arg0: i32, %arg1: i32) -> (i32, i32) {
    %c0_i32 = arith.constant 0 : i32
    %c0_i32_0 = arith.constant 0 : i32
    return %c0_i32, %arg1 : i32, i32
  }
  func.func @transform_2(%arg0: i32, %arg1: i32) -> (i32, i32) {
    %c0_i32 = arith.constant 0 : i32
    %c0_i32_0 = arith.constant 0 : i32
    return %c0_i32, %arg1 : i32, i32
  }
  func.func @transform_3(%arg0: i32, %arg1: i32) -> (i32, i32) {
    %c0_i32 = arith.constant 0 : i32
    return %arg0, %arg1 : i32, i32
  }
}

module attributes {stable_mosaic.version = 11 : i64} {
  func.func @mamba_block_kernel(%arg0: i32, %arg1: memref<1x8x128xbf16, #tpu.memory_space<vmem>>, %arg2: memref<128x256xbf16, #tpu.memory_space<vmem>>, %arg3: memref<128x256xbf16, #tpu.memory_space<vmem>>, %arg4: memref<4x256xf32, #tpu.memory_space<vmem>>, %arg5: memref<1x256xf32, #tpu.memory_space<vmem>>, %arg6: memref<256x256xbf16, #tpu.memory_space<vmem>>, %arg7: memref<1x256xf32, #tpu.memory_space<vmem>>, %arg8: memref<16x256xf32, #tpu.memory_space<vmem>>, %arg9: memref<16x256xf32, #tpu.memory_space<vmem>>, %arg10: memref<256x256xf32, #tpu.memory_space<vmem>>, %arg11: memref<16x256xf32, #tpu.memory_space<vmem>>, %arg12: memref<1x256xf32, #tpu.memory_space<vmem>>, %arg13: memref<256x128xbf16, #tpu.memory_space<vmem>>, %arg14: memref<1x8x128xbf16, #tpu.memory_space<vmem>>) attributes {dimension_semantics = [#tpu.dimension_semantics<parallel>], iteration_bounds = array<i64: 1>, scalar_prefetch = 0 : i64, scratch_operands = 0 : i64, tpu.core_type = #tpu.core_type<tc>, window_params = [{transform_indices = @transform_0, window_bounds = array<i64: 1, 8, 128>}, {pipeline_mode = #tpu.pipeline_mode<synchronous>, transform_indices = @transform_1, window_bounds = array<i64: 128, 256>}, {pipeline_mode = #tpu.pipeline_mode<synchronous>, transform_indices = @transform_2, window_bounds = array<i64: 128, 256>}, {pipeline_mode = #tpu.pipeline_mode<synchronous>, transform_indices = @transform_3, window_bounds = array<i64: 4, 256>}, {pipeline_mode = #tpu.pipeline_mode<synchronous>, transform_indices = @transform_4, window_bounds = array<i64: 1, 256>}, {pipeline_mode = #tpu.pipeline_mode<synchronous>, transform_indices = @transform_5, window_bounds = array<i64: 256, 256>}, {pipeline_mode = #tpu.pipeline_mode<synchronous>, transform_indices = @transform_6, window_bounds = array<i64: 1, 256>}, {pipeline_mode = #tpu.pipeline_mode<synchronous>, transform_indices = @transform_7, window_bounds = array<i64: 16, 256>}, {pipeline_mode = #tpu.pipeline_mode<synchronous>, transform_indices = @transform_8, window_bounds = array<i64: 16, 256>}, {pipeline_mode = #tpu.pipeline_mode<synchronous>, transform_indices = @transform_9, window_bounds = array<i64: 256, 256>}, {pipeline_mode = #tpu.pipeline_mode<synchronous>, transform_indices = @transform_10, window_bounds = array<i64: 16, 256>}, {pipeline_mode = #tpu.pipeline_mode<synchronous>, transform_indices = @transform_11, window_bounds = array<i64: 1, 256>}, {pipeline_mode = #tpu.pipeline_mode<synchronous>, transform_indices = @transform_12, window_bounds = array<i64: 256, 128>}, {transform_indices = @transform_13, window_bounds = array<i64: 1, 8, 128>}]} {
    %c0 = arith.constant 0 : index
    %c0_0 = arith.constant 0 : index
    %c0_1 = arith.constant 0 : index
    %0 = vector.load %arg1[%c0, %c0_0, %c0_1] : memref<1x8x128xbf16, #tpu.memory_space<vmem>>, vector<1x8x128xbf16>
    %1 = vector.shape_cast %0 : vector<1x8x128xbf16> to vector<8x128xbf16>
    %c0_2 = arith.constant 0 : index
    %c0_3 = arith.constant 0 : index
    %2 = vector.load %arg2[%c0_2, %c0_3] : memref<128x256xbf16, #tpu.memory_space<vmem>>, vector<128x256xbf16>
    %cst = arith.constant dense<0.000000e+00> : vector<8x256xf32>
    %3 = tpu.matmul %1, %2, %cst {dimension_numbers = #tpu.dot_dimension_numbers<[1], [0], [0], [1], [0, 0, 1, 1], [], []>} : vector<8x128xbf16>, vector<128x256xbf16>, vector<8x256xf32> -> vector<8x256xf32>
    %c0_4 = arith.constant 0 : index
    %c0_5 = arith.constant 0 : index
    %4 = vector.load %arg3[%c0_4, %c0_5] : memref<128x256xbf16, #tpu.memory_space<vmem>>, vector<128x256xbf16>
    %cst_6 = arith.constant dense<0.000000e+00> : vector<8x256xf32>
    %5 = tpu.matmul %1, %4, %cst_6 {dimension_numbers = #tpu.dot_dimension_numbers<[1], [0], [0], [1], [0, 0, 1, 1], [], []>} : vector<8x128xbf16>, vector<128x256xbf16>, vector<8x256xf32> -> vector<8x256xf32>
    %c0_7 = arith.constant 0 : index
    %c0_8 = arith.constant 0 : index
    %6 = vector.load %arg4[%c0_7, %c0_8] : memref<4x256xf32, #tpu.memory_space<vmem>>, vector<4x256xf32>
    %cst_9 = arith.constant 0.000000e+00 : f32
    %7 = vector.broadcast %cst_9 : f32 to vector<3x256xf32>
    %8 = tpu.concatenate %7, %3 in 0 : vector<3x256xf32>, vector<8x256xf32> -> vector<11x256xf32>
    %c0_10 = arith.constant 0 : index
    %c0_11 = arith.constant 0 : index
    %9 = vector.load %arg5[%c0_10, %c0_11] : memref<1x256xf32, #tpu.memory_space<vmem>>, vector<1x256xf32>
    %10 = vector.shape_cast %9 : vector<1x256xf32> to vector<1x256xf32>
    %11 = vector.broadcast %10 : vector<1x256xf32> to vector<8x256xf32>
    %12 = vector.extract_strided_slice %6 {offsets = [0, 0], sizes = [1, 256], strides = [1, 1]} : vector<4x256xf32> to vector<1x256xf32>
    %13 = vector.extract_strided_slice %8 {offsets = [0, 0], sizes = [8, 256], strides = [1, 1]} : vector<11x256xf32> to vector<8x256xf32>
    %14 = vector.broadcast %12 : vector<1x256xf32> to vector<8x256xf32>
    %15 = arith.mulf %14, %13 : vector<8x256xf32>
    %16 = arith.addf %11, %15 : vector<8x256xf32>
    %17 = vector.extract_strided_slice %6 {offsets = [1, 0], sizes = [1, 256], strides = [1, 1]} : vector<4x256xf32> to vector<1x256xf32>
    %18 = vector.extract_strided_slice %8 {offsets = [1, 0], sizes = [8, 256], strides = [1, 1]} : vector<11x256xf32> to vector<8x256xf32>
    %19 = vector.broadcast %17 : vector<1x256xf32> to vector<8x256xf32>
    %20 = arith.mulf %19, %18 : vector<8x256xf32>
    %21 = arith.addf %16, %20 : vector<8x256xf32>
    %22 = vector.extract_strided_slice %6 {offsets = [2, 0], sizes = [1, 256], strides = [1, 1]} : vector<4x256xf32> to vector<1x256xf32>
    %23 = vector.extract_strided_slice %8 {offsets = [2, 0], sizes = [8, 256], strides = [1, 1]} : vector<11x256xf32> to vector<8x256xf32>
    %24 = vector.broadcast %22 : vector<1x256xf32> to vector<8x256xf32>
    %25 = arith.mulf %24, %23 : vector<8x256xf32>
    %26 = arith.addf %21, %25 : vector<8x256xf32>
    %27 = vector.extract_strided_slice %6 {offsets = [3, 0], sizes = [1, 256], strides = [1, 1]} : vector<4x256xf32> to vector<1x256xf32>
    %28 = vector.extract_strided_slice %8 {offsets = [3, 0], sizes = [8, 256], strides = [1, 1]} : vector<11x256xf32> to vector<8x256xf32>
    %29 = vector.broadcast %27 : vector<1x256xf32> to vector<8x256xf32>
    %30 = arith.mulf %29, %28 : vector<8x256xf32>
    %31 = arith.addf %26, %30 : vector<8x256xf32>
    %cst_12 = arith.constant 0.000000e+00 : f32
    %32 = vector.broadcast %cst_12 : f32 to vector<8x256xf32>
    %33 = arith.subf %32, %31 : vector<8x256xf32>
    %34 = math.exp %33 : vector<8x256xf32>
    %cst_13 = arith.constant 1.000000e+00 : f32
    %35 = vector.broadcast %cst_13 : f32 to vector<8x256xf32>
    %36 = arith.addf %35, %34 : vector<8x256xf32>
    %37 = arith.divf %31, %36 : vector<8x256xf32>
    %38 = arith.truncf %37 : vector<8x256xf32> to vector<8x256xbf16>
    %c0_14 = arith.constant 0 : index
    %c0_15 = arith.constant 0 : index
    %39 = vector.load %arg6[%c0_14, %c0_15] : memref<256x256xbf16, #tpu.memory_space<vmem>>, vector<256x256xbf16>
    %cst_16 = arith.constant dense<0.000000e+00> : vector<8x256xf32>
    %40 = tpu.matmul %38, %39, %cst_16 {dimension_numbers = #tpu.dot_dimension_numbers<[1], [0], [0], [1], [0, 0, 1, 1], [], []>} : vector<8x256xbf16>, vector<256x256xbf16>, vector<8x256xf32> -> vector<8x256xf32>
    %c0_17 = arith.constant 0 : index
    %c0_18 = arith.constant 0 : index
    %41 = vector.load %arg7[%c0_17, %c0_18] : memref<1x256xf32, #tpu.memory_space<vmem>>, vector<1x256xf32>
    %42 = vector.broadcast %41 : vector<1x256xf32> to vector<8x256xf32>
    %43 = arith.addf %40, %42 : vector<8x256xf32>
    %cst_19 = arith.constant 2.000000e+01 : f32
    %44 = vector.broadcast %cst_19 : f32 to vector<8x256xf32>
    %45 = arith.cmpf ogt, %43, %44 : vector<8x256xf32>
    %cst_20 = arith.constant 2.000000e+01 : f32
    %46 = vector.broadcast %cst_20 : f32 to vector<8x256xf32>
    %47 = arith.minimumf %43, %46 : vector<8x256xf32>
    %48 = math.exp %47 : vector<8x256xf32>
    %cst_21 = arith.constant 1.000000e+00 : f32
    %49 = vector.broadcast %cst_21 : f32 to vector<8x256xf32>
    %50 = arith.addf %49, %48 : vector<8x256xf32>
    %51 = math.log %50 : vector<8x256xf32>
    %52 = arith.select %45, %43, %51 : vector<8x256xi1>, vector<8x256xf32>
    %53 = vector.shape_cast %37 : vector<8x256xf32> to vector<8x1x256xf32>
    %c0_22 = arith.constant 0 : index
    %c0_23 = arith.constant 0 : index
    %54 = vector.load %arg8[%c0_22, %c0_23] : memref<16x256xf32, #tpu.memory_space<vmem>>, vector<16x256xf32>
    %55 = vector.shape_cast %54 : vector<16x256xf32> to vector<1x16x256xf32>
    %56 = vector.broadcast %53 : vector<8x1x256xf32> to vector<8x16x256xf32>
    %57 = vector.broadcast %55 : vector<1x16x256xf32> to vector<8x16x256xf32>
    %58 = arith.mulf %56, %57 : vector<8x16x256xf32>
    %59 = vector.shape_cast %58 : vector<8x16x256xf32> to vector<128x256xf32>
    %c0_24 = arith.constant 0 : index
    %c0_25 = arith.constant 0 : index
    %60 = vector.load %arg9[%c0_24, %c0_25] : memref<16x256xf32, #tpu.memory_space<vmem>>, vector<16x256xf32>
    %61 = vector.shape_cast %60 : vector<16x256xf32> to vector<1x16x256xf32>
    %62 = vector.broadcast %53 : vector<8x1x256xf32> to vector<8x16x256xf32>
    %63 = vector.broadcast %61 : vector<1x16x256xf32> to vector<8x16x256xf32>
    %64 = arith.mulf %62, %63 : vector<8x16x256xf32>
    %65 = vector.shape_cast %64 : vector<8x16x256xf32> to vector<128x256xf32>
    %c0_26 = arith.constant 0 : index
    %c0_27 = arith.constant 0 : index
    %66 = vector.load %arg10[%c0_26, %c0_27] : memref<256x256xf32, #tpu.memory_space<vmem>>, vector<256x256xf32>
    %cst_28 = arith.constant dense<0.000000e+00> : vector<128x256xf32>
    %67 = tpu.matmul %59, %66, %cst_28 {dimension_numbers = #tpu.dot_dimension_numbers<[1], [0], [0], [1], [0, 0, 1, 1], [], []>} : vector<128x256xf32>, vector<256x256xf32>, vector<128x256xf32> -> vector<128x256xf32>
    %68 = vector.shape_cast %67 : vector<128x256xf32> to vector<8x16x256xf32>
    %cst_29 = arith.constant dense<0.000000e+00> : vector<128x256xf32>
    %69 = tpu.matmul %65, %66, %cst_29 {dimension_numbers = #tpu.dot_dimension_numbers<[1], [0], [0], [1], [0, 0, 1, 1], [], []>} : vector<128x256xf32>, vector<256x256xf32>, vector<128x256xf32> -> vector<128x256xf32>
    %70 = vector.shape_cast %69 : vector<128x256xf32> to vector<8x16x256xf32>
    %71 = vector.shape_cast %52 : vector<8x256xf32> to vector<8x1x256xf32>
    %c0_30 = arith.constant 0 : index
    %c0_31 = arith.constant 0 : index
    %72 = vector.load %arg11[%c0_30, %c0_31] : memref<16x256xf32, #tpu.memory_space<vmem>>, vector<16x256xf32>
    %73 = vector.shape_cast %72 : vector<16x256xf32> to vector<1x16x256xf32>
    %74 = vector.broadcast %71 : vector<8x1x256xf32> to vector<8x16x256xf32>
    %75 = vector.broadcast %73 : vector<1x16x256xf32> to vector<8x16x256xf32>
    %76 = arith.mulf %74, %75 : vector<8x16x256xf32>
    %77 = math.exp %76 : vector<8x16x256xf32>
    %78 = arith.mulf %52, %37 : vector<8x256xf32>
    %79 = vector.shape_cast %78 : vector<8x256xf32> to vector<8x1x256xf32>
    %80 = vector.broadcast %79 : vector<8x1x256xf32> to vector<8x16x256xf32>
    %81 = arith.mulf %80, %68 : vector<8x16x256xf32>
    %cst_32 = arith.constant 0.000000e+00 : f32
    %82 = vector.broadcast %cst_32 : f32 to vector<16x256xf32>
    %83 = vector.extract_strided_slice %77 {offsets = [0, 0, 0], sizes = [1, 16, 256], strides = [1, 1, 1]} : vector<8x16x256xf32> to vector<1x16x256xf32>
    %84 = vector.shape_cast %83 : vector<1x16x256xf32> to vector<16x256xf32>
    %85 = arith.mulf %84, %82 : vector<16x256xf32>
    %86 = vector.extract_strided_slice %81 {offsets = [0, 0, 0], sizes = [1, 16, 256], strides = [1, 1, 1]} : vector<8x16x256xf32> to vector<1x16x256xf32>
    %87 = vector.shape_cast %86 : vector<1x16x256xf32> to vector<16x256xf32>
    %88 = arith.addf %85, %87 : vector<16x256xf32>
    %89 = vector.extract_strided_slice %70 {offsets = [0, 0, 0], sizes = [1, 16, 256], strides = [1, 1, 1]} : vector<8x16x256xf32> to vector<1x16x256xf32>
    %90 = vector.shape_cast %89 : vector<1x16x256xf32> to vector<16x256xf32>
    %91 = arith.mulf %88, %90 : vector<16x256xf32>
    %cst_33 = arith.constant dense<0.000000e+00> : vector<256xf32>
    %92 = vector.multi_reduction <add>, %91, %cst_33 [0] : vector<16x256xf32> to vector<256xf32>
    %93 = vector.shape_cast %92 : vector<256xf32> to vector<1x256xf32>
    %94 = vector.extract_strided_slice %77 {offsets = [1, 0, 0], sizes = [1, 16, 256], strides = [1, 1, 1]} : vector<8x16x256xf32> to vector<1x16x256xf32>
    %95 = vector.shape_cast %94 : vector<1x16x256xf32> to vector<16x256xf32>
    %96 = arith.mulf %95, %88 : vector<16x256xf32>
    %97 = vector.extract_strided_slice %81 {offsets = [1, 0, 0], sizes = [1, 16, 256], strides = [1, 1, 1]} : vector<8x16x256xf32> to vector<1x16x256xf32>
    %98 = vector.shape_cast %97 : vector<1x16x256xf32> to vector<16x256xf32>
    %99 = arith.addf %96, %98 : vector<16x256xf32>
    %100 = vector.extract_strided_slice %70 {offsets = [1, 0, 0], sizes = [1, 16, 256], strides = [1, 1, 1]} : vector<8x16x256xf32> to vector<1x16x256xf32>
    %101 = vector.shape_cast %100 : vector<1x16x256xf32> to vector<16x256xf32>
    %102 = arith.mulf %99, %101 : vector<16x256xf32>
    %cst_34 = arith.constant dense<0.000000e+00> : vector<256xf32>
    %103 = vector.multi_reduction <add>, %102, %cst_34 [0] : vector<16x256xf32> to vector<256xf32>
    %104 = vector.shape_cast %103 : vector<256xf32> to vector<1x256xf32>
    %105 = vector.extract_strided_slice %77 {offsets = [2, 0, 0], sizes = [1, 16, 256], strides = [1, 1, 1]} : vector<8x16x256xf32> to vector<1x16x256xf32>
    %106 = vector.shape_cast %105 : vector<1x16x256xf32> to vector<16x256xf32>
    %107 = arith.mulf %106, %99 : vector<16x256xf32>
    %108 = vector.extract_strided_slice %81 {offsets = [2, 0, 0], sizes = [1, 16, 256], strides = [1, 1, 1]} : vector<8x16x256xf32> to vector<1x16x256xf32>
    %109 = vector.shape_cast %108 : vector<1x16x256xf32> to vector<16x256xf32>
    %110 = arith.addf %107, %109 : vector<16x256xf32>
    %111 = vector.extract_strided_slice %70 {offsets = [2, 0, 0], sizes = [1, 16, 256], strides = [1, 1, 1]} : vector<8x16x256xf32> to vector<1x16x256xf32>
    %112 = vector.shape_cast %111 : vector<1x16x256xf32> to vector<16x256xf32>
    %113 = arith.mulf %110, %112 : vector<16x256xf32>
    %cst_35 = arith.constant dense<0.000000e+00> : vector<256xf32>
    %114 = vector.multi_reduction <add>, %113, %cst_35 [0] : vector<16x256xf32> to vector<256xf32>
    %115 = vector.shape_cast %114 : vector<256xf32> to vector<1x256xf32>
    %116 = vector.extract_strided_slice %77 {offsets = [3, 0, 0], sizes = [1, 16, 256], strides = [1, 1, 1]} : vector<8x16x256xf32> to vector<1x16x256xf32>
    %117 = vector.shape_cast %116 : vector<1x16x256xf32> to vector<16x256xf32>
    %118 = arith.mulf %117, %110 : vector<16x256xf32>
    %119 = vector.extract_strided_slice %81 {offsets = [3, 0, 0], sizes = [1, 16, 256], strides = [1, 1, 1]} : vector<8x16x256xf32> to vector<1x16x256xf32>
    %120 = vector.shape_cast %119 : vector<1x16x256xf32> to vector<16x256xf32>
    %121 = arith.addf %118, %120 : vector<16x256xf32>
    %122 = vector.extract_strided_slice %70 {offsets = [3, 0, 0], sizes = [1, 16, 256], strides = [1, 1, 1]} : vector<8x16x256xf32> to vector<1x16x256xf32>
    %123 = vector.shape_cast %122 : vector<1x16x256xf32> to vector<16x256xf32>
    %124 = arith.mulf %121, %123 : vector<16x256xf32>
    %cst_36 = arith.constant dense<0.000000e+00> : vector<256xf32>
    %125 = vector.multi_reduction <add>, %124, %cst_36 [0] : vector<16x256xf32> to vector<256xf32>
    %126 = vector.shape_cast %125 : vector<256xf32> to vector<1x256xf32>
    %127 = vector.extract_strided_slice %77 {offsets = [4, 0, 0], sizes = [1, 16, 256], strides = [1, 1, 1]} : vector<8x16x256xf32> to vector<1x16x256xf32>
    %128 = vector.shape_cast %127 : vector<1x16x256xf32> to vector<16x256xf32>
    %129 = arith.mulf %128, %121 : vector<16x256xf32>
    %130 = vector.extract_strided_slice %81 {offsets = [4, 0, 0], sizes = [1, 16, 256], strides = [1, 1, 1]} : vector<8x16x256xf32> to vector<1x16x256xf32>
    %131 = vector.shape_cast %130 : vector<1x16x256xf32> to vector<16x256xf32>
    %132 = arith.addf %129, %131 : vector<16x256xf32>
    %133 = vector.extract_strided_slice %70 {offsets = [4, 0, 0], sizes = [1, 16, 256], strides = [1, 1, 1]} : vector<8x16x256xf32> to vector<1x16x256xf32>
    %134 = vector.shape_cast %133 : vector<1x16x256xf32> to vector<16x256xf32>
    %135 = arith.mulf %132, %134 : vector<16x256xf32>
    %cst_37 = arith.constant dense<0.000000e+00> : vector<256xf32>
    %136 = vector.multi_reduction <add>, %135, %cst_37 [0] : vector<16x256xf32> to vector<256xf32>
    %137 = vector.shape_cast %136 : vector<256xf32> to vector<1x256xf32>
    %138 = vector.extract_strided_slice %77 {offsets = [5, 0, 0], sizes = [1, 16, 256], strides = [1, 1, 1]} : vector<8x16x256xf32> to vector<1x16x256xf32>
    %139 = vector.shape_cast %138 : vector<1x16x256xf32> to vector<16x256xf32>
    %140 = arith.mulf %139, %132 : vector<16x256xf32>
    %141 = vector.extract_strided_slice %81 {offsets = [5, 0, 0], sizes = [1, 16, 256], strides = [1, 1, 1]} : vector<8x16x256xf32> to vector<1x16x256xf32>
    %142 = vector.shape_cast %141 : vector<1x16x256xf32> to vector<16x256xf32>
    %143 = arith.addf %140, %142 : vector<16x256xf32>
    %144 = vector.extract_strided_slice %70 {offsets = [5, 0, 0], sizes = [1, 16, 256], strides = [1, 1, 1]} : vector<8x16x256xf32> to vector<1x16x256xf32>
    %145 = vector.shape_cast %144 : vector<1x16x256xf32> to vector<16x256xf32>
    %146 = arith.mulf %143, %145 : vector<16x256xf32>
    %cst_38 = arith.constant dense<0.000000e+00> : vector<256xf32>
    %147 = vector.multi_reduction <add>, %146, %cst_38 [0] : vector<16x256xf32> to vector<256xf32>
    %148 = vector.shape_cast %147 : vector<256xf32> to vector<1x256xf32>
    %149 = vector.extract_strided_slice %77 {offsets = [6, 0, 0], sizes = [1, 16, 256], strides = [1, 1, 1]} : vector<8x16x256xf32> to vector<1x16x256xf32>
    %150 = vector.shape_cast %149 : vector<1x16x256xf32> to vector<16x256xf32>
    %151 = arith.mulf %150, %143 : vector<16x256xf32>
    %152 = vector.extract_strided_slice %81 {offsets = [6, 0, 0], sizes = [1, 16, 256], strides = [1, 1, 1]} : vector<8x16x256xf32> to vector<1x16x256xf32>
    %153 = vector.shape_cast %152 : vector<1x16x256xf32> to vector<16x256xf32>
    %154 = arith.addf %151, %153 : vector<16x256xf32>
    %155 = vector.extract_strided_slice %70 {offsets = [6, 0, 0], sizes = [1, 16, 256], strides = [1, 1, 1]} : vector<8x16x256xf32> to vector<1x16x256xf32>
    %156 = vector.shape_cast %155 : vector<1x16x256xf32> to vector<16x256xf32>
    %157 = arith.mulf %154, %156 : vector<16x256xf32>
    %cst_39 = arith.constant dense<0.000000e+00> : vector<256xf32>
    %158 = vector.multi_reduction <add>, %157, %cst_39 [0] : vector<16x256xf32> to vector<256xf32>
    %159 = vector.shape_cast %158 : vector<256xf32> to vector<1x256xf32>
    %160 = vector.extract_strided_slice %77 {offsets = [7, 0, 0], sizes = [1, 16, 256], strides = [1, 1, 1]} : vector<8x16x256xf32> to vector<1x16x256xf32>
    %161 = vector.shape_cast %160 : vector<1x16x256xf32> to vector<16x256xf32>
    %162 = arith.mulf %161, %154 : vector<16x256xf32>
    %163 = vector.extract_strided_slice %81 {offsets = [7, 0, 0], sizes = [1, 16, 256], strides = [1, 1, 1]} : vector<8x16x256xf32> to vector<1x16x256xf32>
    %164 = vector.shape_cast %163 : vector<1x16x256xf32> to vector<16x256xf32>
    %165 = arith.addf %162, %164 : vector<16x256xf32>
    %166 = vector.extract_strided_slice %70 {offsets = [7, 0, 0], sizes = [1, 16, 256], strides = [1, 1, 1]} : vector<8x16x256xf32> to vector<1x16x256xf32>
    %167 = vector.shape_cast %166 : vector<1x16x256xf32> to vector<16x256xf32>
    %168 = arith.mulf %165, %167 : vector<16x256xf32>
    %cst_40 = arith.constant dense<0.000000e+00> : vector<256xf32>
    %169 = vector.multi_reduction <add>, %168, %cst_40 [0] : vector<16x256xf32> to vector<256xf32>
    %170 = vector.shape_cast %169 : vector<256xf32> to vector<1x256xf32>
    %171 = tpu.concatenate %93, %104, %115, %126, %137, %148, %159, %170 in 0 : vector<1x256xf32>, vector<1x256xf32>, vector<1x256xf32>, vector<1x256xf32>, vector<1x256xf32>, vector<1x256xf32>, vector<1x256xf32>, vector<1x256xf32> -> vector<8x256xf32>
    %c0_41 = arith.constant 0 : index
    %c0_42 = arith.constant 0 : index
    %172 = vector.load %arg12[%c0_41, %c0_42] : memref<1x256xf32, #tpu.memory_space<vmem>>, vector<1x256xf32>
    %173 = vector.broadcast %172 : vector<1x256xf32> to vector<8x256xf32>
    %174 = arith.mulf %173, %37 : vector<8x256xf32>
    %175 = arith.addf %171, %174 : vector<8x256xf32>
    %cst_43 = arith.constant 0.000000e+00 : f32
    %176 = vector.broadcast %cst_43 : f32 to vector<8x256xf32>
    %177 = arith.subf %176, %5 : vector<8x256xf32>
    %178 = math.exp %177 : vector<8x256xf32>
    %cst_44 = arith.constant 1.000000e+00 : f32
    %179 = vector.broadcast %cst_44 : f32 to vector<8x256xf32>
    %180 = arith.addf %179, %178 : vector<8x256xf32>
    %181 = arith.divf %5, %180 : vector<8x256xf32>
    %182 = arith.mulf %175, %181 : vector<8x256xf32>
    %183 = arith.truncf %182 : vector<8x256xf32> to vector<8x256xbf16>
    %c0_45 = arith.constant 0 : index
    %c0_46 = arith.constant 0 : index
    %184 = vector.load %arg13[%c0_45, %c0_46] : memref<256x128xbf16, #tpu.memory_space<vmem>>, vector<256x128xbf16>
    %cst_47 = arith.constant dense<0.000000e+00> : vector<8x128xf32>
    %185 = tpu.matmul %183, %184, %cst_47 {dimension_numbers = #tpu.dot_dimension_numbers<[1], [0], [0], [1], [0, 0, 1, 1], [], []>} : vector<8x256xbf16>, vector<256x128xbf16>, vector<8x128xf32> -> vector<8x128xf32>
    %186 = arith.truncf %185 : vector<8x128xf32> to vector<8x128xbf16>
    %c0_48 = arith.constant 0 : index
    %c0_49 = arith.constant 0 : index
    %c0_50 = arith.constant 0 : index
    %187 = vector.load %arg14[%c0_48, %c0_49, %c0_50] : memref<1x8x128xbf16, #tpu.memory_space<vmem>>, vector<1x8x128xbf16>
    %188 = vector.shape_cast %187 : vector<1x8x128xbf16> to vector<8x128xbf16>
    %189 = vector.shape_cast %186 : vector<8x128xbf16> to vector<1x8x128xbf16>
    tpu.vector_store %arg14[%c0_48, %c0_49, %c0_50], %189 {strides = array<i32>} : memref<1x8x128xbf16, #tpu.memory_space<vmem>>, vector<1x8x128xbf16>,
    return
  }
  func.func @transform_0(%arg0: i32) -> (i32, i32, i32) {
    %c0_i32 = arith.constant 0 : i32
    %c0_i32_0 = arith.constant 0 : i32
    %c0_i32_1 = arith.constant 0 : i32
    return %arg0, %c0_i32, %c0_i32_0 : i32, i32, i32
  }
  func.func @transform_1(%arg0: i32) -> (i32, i32) {
    %c0_i32 = arith.constant 0 : i32
    %c0_i32_0 = arith.constant 0 : i32
    %c0_i32_1 = arith.constant 0 : i32
    return %c0_i32, %c0_i32_0 : i32, i32
  }
  func.func @transform_2(%arg0: i32) -> (i32, i32) {
    %c0_i32 = arith.constant 0 : i32
    %c0_i32_0 = arith.constant 0 : i32
    %c0_i32_1 = arith.constant 0 : i32
    return %c0_i32, %c0_i32_0 : i32, i32
  }
  func.func @transform_3(%arg0: i32) -> (i32, i32) {
    %c0_i32 = arith.constant 0 : i32
    %c0_i32_0 = arith.constant 0 : i32
    %c0_i32_1 = arith.constant 0 : i32
    return %c0_i32, %c0_i32_0 : i32, i32
  }
  func.func @transform_4(%arg0: i32) -> (i32, i32) {
    %c0_i32 = arith.constant 0 : i32
    %c0_i32_0 = arith.constant 0 : i32
    %c0_i32_1 = arith.constant 0 : i32
    return %c0_i32, %c0_i32_0 : i32, i32
  }
  func.func @transform_5(%arg0: i32) -> (i32, i32) {
    %c0_i32 = arith.constant 0 : i32
    %c0_i32_0 = arith.constant 0 : i32
    %c0_i32_1 = arith.constant 0 : i32
    return %c0_i32, %c0_i32_0 : i32, i32
  }
  func.func @transform_6(%arg0: i32) -> (i32, i32) {
    %c0_i32 = arith.constant 0 : i32
    %c0_i32_0 = arith.constant 0 : i32
    %c0_i32_1 = arith.constant 0 : i32
    return %c0_i32, %c0_i32_0 : i32, i32
  }
  func.func @transform_7(%arg0: i32) -> (i32, i32) {
    %c0_i32 = arith.constant 0 : i32
    %c0_i32_0 = arith.constant 0 : i32
    %c0_i32_1 = arith.constant 0 : i32
    return %c0_i32, %c0_i32_0 : i32, i32
  }
  func.func @transform_8(%arg0: i32) -> (i32, i32) {
    %c0_i32 = arith.constant 0 : i32
    %c0_i32_0 = arith.constant 0 : i32
    %c0_i32_1 = arith.constant 0 : i32
    return %c0_i32, %c0_i32_0 : i32, i32
  }
  func.func @transform_9(%arg0: i32) -> (i32, i32) {
    %c0_i32 = arith.constant 0 : i32
    %c0_i32_0 = arith.constant 0 : i32
    %c0_i32_1 = arith.constant 0 : i32
    return %c0_i32, %c0_i32_0 : i32, i32
  }
  func.func @transform_10(%arg0: i32) -> (i32, i32) {
    %c0_i32 = arith.constant 0 : i32
    %c0_i32_0 = arith.constant 0 : i32
    %c0_i32_1 = arith.constant 0 : i32
    return %c0_i32, %c0_i32_0 : i32, i32
  }
  func.func @transform_11(%arg0: i32) -> (i32, i32) {
    %c0_i32 = arith.constant 0 : i32
    %c0_i32_0 = arith.constant 0 : i32
    %c0_i32_1 = arith.constant 0 : i32
    return %c0_i32, %c0_i32_0 : i32, i32
  }
  func.func @transform_12(%arg0: i32) -> (i32, i32) {
    %c0_i32 = arith.constant 0 : i32
    %c0_i32_0 = arith.constant 0 : i32
    %c0_i32_1 = arith.constant 0 : i32
    return %c0_i32, %c0_i32_0 : i32, i32
  }
  func.func @transform_13(%arg0: i32) -> (i32, i32, i32) {
    %c0_i32 = arith.constant 0 : i32
    %c0_i32_0 = arith.constant 0 : i32
    %c0_i32_1 = arith.constant 0 : i32
    return %arg0, %c0_i32, %c0_i32_0 : i32, i32, i32
  }
}

</mosaic_0001>

<llo_original>
// kernel: tile.54
$region0: #{tile.54}
  %s0 = inlined_call_operand.vmem [shape: f32[16,8,32], index: 0, kind: input, shape index: {}]
  %s1 = inlined_call_operand.vmem [shape: f32[16,256], index: 1, kind: output, shape index: {}]
  %v2 = vld [vmem:[%s0] ss:$4 sm:$0xff]
  %vm3 = vcmask 261120
  %4 = vst.msk [vmem:[%s1] ss:$8 sm:$0x3] %vm3, %v2
  %s5 = scalar_lea.vmem %s1, 4294967281
  %6 = vst.msk [vmem:[%s5] ss:$8 sm:$0xc] %vm3, %v2
  %s7 = scalar_lea.vmem %s1, 4294967266
  %8 = vst.msk [vmem:[%s7] ss:$8 sm:$0x30] %vm3, %v2
  %s9 = scalar_lea.vmem %s1, 4294967251
  %10 = vst.msk [vmem:[%s9] ss:$8 sm:$0xc0] %vm3, %v2
  %s11 = scalar_lea.vmem %s0, 32
  %v12 = vld [vmem:[%s11] ss:$4 sm:$0xff]
  %vm13 = vcmask 261120
  %s14 = scalar_lea.vmem %s1, 4
  %15 = vst.msk [vmem:[%s14] ss:$8 sm:$0x3] %vm13, %v12
  %s16 = scalar_lea.vmem %s1, 4294967285
  %17 = vst.msk [vmem:[%s16] ss:$8 sm:$0xc] %vm13, %v12
  %s18 = scalar_lea.vmem %s1, 4294967270
  %19 = vst.msk [vmem:[%s18] ss:$8 sm:$0x30] %vm13, %v12
  %s20 = scalar_lea.vmem %s1, 4294967255
  %21 = vst.msk [vmem:[%s20] ss:$8 sm:$0xc0] %vm13, %v12
  %s22 = scalar_lea.vmem %s0, 64
  %v23 = vld [vmem:[%s22] ss:$4 sm:$0xff]
  %vm24 = vcmask 261120
  %s25 = scalar_lea.vmem %s1, 16
  %26 = vst.msk [vmem:[%s25] ss:$8 sm:$0x3] %vm24, %v23
  %s27 = scalar_lea.vmem %s1, 1
  %28 = vst.msk [vmem:[%s27] ss:$8 sm:$0xc] %vm24, %v23
  %s29 = scalar_lea.vmem %s1, 4294967282
  %30 = vst.msk [vmem:[%s29] ss:$8 sm:$0x30] %vm24, %v23
  %s31 = scalar_lea.vmem %s1, 4294967267
  %32 = vst.msk [vmem:[%s31] ss:$8 sm:$0xc0] %vm24, %v23
  %s33 = scalar_lea.vmem %s0, 96
  %v34 = vld [vmem:[%s33] ss:$4 sm:$0xff]
  %vm35 = vcmask 261120
  %s36 = scalar_lea.vmem %s1, 20
  %37 = vst.msk [vmem:[%s36] ss:$8 sm:$0x3] %vm35, %v34
  %s38 = scalar_lea.vmem %s1, 5
  %39 = vst.msk [vmem:[%s38] ss:$8 sm:$0xc] %vm35, %v34
  %s40 = scalar_lea.vmem %s1, 4294967286
  %41 = vst.msk [vmem:[%s40] ss:$8 sm:$0x30] %vm35, %v34
  %s42 = scalar_lea.vmem %s1, 4294967271
  %43 = vst.msk [vmem:[%s42] ss:$8 sm:$0xc0] %vm35, %v34
  %s44 = scalar_lea.vmem %s0, 3
  %v45 = vld [vmem:[%s44] ss:$8 sm:$0xf]
  %s46 = scalar_lea.vmem %s0, 3
  %v47 = vld [vmem:[%s46] ss:$8 sm:$0xf0]
  %vm48 = vcmask 1047556
  %v49 = vsel %vm48, %v47, %v45
  %50 = vrot.lane.b32.xlu0 %v49, 96
  %v51 = vpop.permute.xlu0 %50
  %vm52 = vcmask 1048320
  %53 = vst.msk [vmem:[%s1] sm:$0xff] %vm52, %v51
  %s54 = scalar_lea.vmem %s0, 7
  %v55 = vld [vmem:[%s54] ss:$8 sm:$0xf]
  %s56 = scalar_lea.vmem %s0, 7
  %v57 = vld [vmem:[%s56] ss:$8 sm:$0xf0]
  %vm58 = vcmask 1047556
  %v59 = vsel %vm58, %v57, %v55
  %60 = vrot.lane.b32.xlu0 %v59, 96
  %v61 = vpop.permute.xlu0 %60
  %vm62 = vcmask 1048320
  %s63 = scalar_lea.vmem %s1, 8
  %64 = vst.msk [vmem:[%s63] sm:$0xff] %vm62, %v61
  %s65 = scalar_lea.vmem %s0, 67
  %v66 = vld [vmem:[%s65] ss:$8 sm:$0xf]
  %s67 = scalar_lea.vmem %s0, 67
  %v68 = vld [vmem:[%s67] ss:$8 sm:$0xf0]
  %vm69 = vcmask 1047556
  %v70 = vsel %vm69, %v68, %v66
  %71 = vrot.lane.b32.xlu0 %v70, 96
  %v72 = vpop.permute.xlu0 %71
  %vm73 = vcmask 1048320
  %s74 = scalar_lea.vmem %s1, 16
  %75 = vst.msk [vmem:[%s74] sm:$0xff] %vm73, %v72
  %s76 = scalar_lea.vmem %s0, 71
  %v77 = vld [vmem:[%s76] ss:$8 sm:$0xf]
  %s78 = scalar_lea.vmem %s0, 71
  %v79 = vld [vmem:[%s78] ss:$8 sm:$0xf0]
  %vm80 = vcmask 1047556
  %v81 = vsel %vm80, %v79, %v77
  %82 = vrot.lane.b32.xlu0 %v81, 96
  %v83 = vpop.permute.xlu0 %82
  %vm84 = vcmask 1048320
  %s85 = scalar_lea.vmem %s1, 24
  %86 = vst.msk [vmem:[%s85] sm:$0xff] %vm84, %v83
  %s87 = scalar_lea.vmem %s0, 2
  %v88 = vld [vmem:[%s87] ss:$8 sm:$0xf]
  %s89 = scalar_lea.vmem %s0, 2
  %v90 = vld [vmem:[%s89] ss:$8 sm:$0xf0]
  %vm91 = vcmask 1047556
  %v92 = vsel %vm91, %v90, %v88
  %93 = vrot.lane.b32.xlu0 %v92, 64
  %v94 = vpop.permute.xlu0 %93
  %vm95 = vcmask 785920
  %96 = vst.msk [vmem:[%s1] sm:$0xff] %vm95, %v94
  %s97 = scalar_lea.vmem %s0, 6
  %v98 = vld [vmem:[%s97] ss:$8 sm:$0xf]
  %s99 = scalar_lea.vmem %s0, 6
  %v100 = vld [vmem:[%s99] ss:$8 sm:$0xf0]
  %vm101 = vcmask 1047556
  %v102 = vsel %vm101, %v100, %v98
  %103 = vrot.lane.b32.xlu0 %v102, 64
  %v104 = vpop.permute.xlu0 %103
  %vm105 = vcmask 785920
  %s106 = scalar_lea.vmem %s1, 8
  %107 = vst.msk [vmem:[%s106] sm:$0xff] %vm105, %v104
  %s108 = scalar_lea.vmem %s0, 66
  %v109 = vld [vmem:[%s108] ss:$8 sm:$0xf]
  %s110 = scalar_lea.vmem %s0, 66
  %v111 = vld [vmem:[%s110] ss:$8 sm:$0xf0]
  %vm112 = vcmask 1047556
  %v113 = vsel %vm112, %v111, %v109
  %114 = vrot.lane.b32.xlu0 %v113, 64
  %v115 = vpop.permute.xlu0 %114
  %vm116 = vcmask 785920
  %s117 = scalar_lea.vmem %s1, 16
  %118 = vst.msk [vmem:[%s117] sm:$0xff] %vm116, %v115
  %s119 = scalar_lea.vmem %s0, 70
  %v120 = vld [vmem:[%s119] ss:$8 sm:$0xf]
  %s121 = scalar_lea.vmem %s0, 70
  %v122 = vld [vmem:[%s121] ss:$8 sm:$0xf0]
  %vm123 = vcmask 1047556
  %v124 = vsel %vm123, %v122, %v120
  %125 = vrot.lane.b32.xlu0 %v124, 64
  %v126 = vpop.permute.xlu0 %125
  %vm127 = vcmask 785920
  %s128 = scalar_lea.vmem %s1, 24
  %129 = vst.msk [vmem:[%s128] sm:$0xff] %vm127, %v126
  %s130 = scalar_lea.vmem %s0, 1
  %v131 = vld [vmem:[%s130] ss:$8 sm:$0xf]
  %s132 = scalar_lea.vmem %s0, 1
  %v133 = vld [vmem:[%s132] ss:$8 sm:$0xf0]
  %vm134 = vcmask 1047556
  %v135 = vsel %vm134, %v133, %v131
  %136 = vrot.lane.b32.xlu0 %v135, 32
  %v137 = vpop.permute.xlu0 %136
  %vm138 = vcmask 523520
  %139 = vst.msk [vmem:[%s1] sm:$0xff] %vm138, %v137
  %s140 = scalar_lea.vmem %s0, 5
  %v141 = vld [vmem:[%s140] ss:$8 sm:$0xf]
  %s142 = scalar_lea.vmem %s0, 5
  %v143 = vld [vmem:[%s142] ss:$8 sm:$0xf0]
  %vm144 = vcmask 1047556
  %v145 = vsel %vm144, %v143, %v141
  %146 = vrot.lane.b32.xlu0 %v145, 32
  %v147 = vpop.permute.xlu0 %146
  %vm148 = vcmask 523520
  %s149 = scalar_lea.vmem %s1, 8
  %150 = vst.msk [vmem:[%s149] sm:$0xff] %vm148, %v147
  %s151 = scalar_lea.vmem %s0, 65
  %v152 = vld [vmem:[%s151] ss:$8 sm:$0xf]
  %s153 = scalar_lea.vmem %s0, 65
  %v154 = vld [vmem:[%s153] ss:$8 sm:$0xf0]
  %vm155 = vcmask 1047556
  %v156 = vsel %vm155, %v154, %v152
  %157 = vrot.lane.b32.xlu0 %v156, 32
  %v158 = vpop.permute.xlu0 %157
  %vm159 = vcmask 523520
  %s160 = scalar_lea.vmem %s1, 16
  %161 = vst.msk [vmem:[%s160] sm:$0xff] %vm159, %v158
  %s162 = scalar_lea.vmem %s0, 69
  %v163 = vld [vmem:[%s162] ss:$8 sm:$0xf]
  %s164 = scalar_lea.vmem %s0, 69
  %v165 = vld [vmem:[%s164] ss:$8 sm:$0xf0]
  %vm166 = vcmask 1047556
  %v167 = vsel %vm166, %v165, %v163
  %168 = vrot.lane.b32.xlu0 %v167, 32
  %v169 = vpop.permute.xlu0 %168
  %vm170 = vcmask 523520
  %s171 = scalar_lea.vmem %s1, 24
  %172 = vst.msk [vmem:[%s171] sm:$0xff] %vm170, %v169

// kernel: tile.39
$region0: #{tile.39}
  %s0 = inlined_call_operand.vmem [shape: f32[4,8,32], index: 0, kind: input, shape index: {}]
  %s1 = inlined_call_operand.vmem [shape: f32[4,256], index: 1, kind: output, shape index: {}]
  $region1: #{tile.39} parent=0
    #allocation0 [shape = 'u8[8192]{0}', space=vmem, size = 0x2000, scoped, tag = 'scoped mem for output reshape']
    %v2 = vld [vmem:[%s0] ss:$4 sm:$0xff]
    %vm3 = vcmask 261120
    %4 = vst.msk [vmem:[#allocation0] ss:$8 sm:$0x3] %vm3, %v2
    %s5 = scalar_lea.vmem [#allocation0], 4294967281
    %6 = vst.msk [vmem:[%s5] ss:$8 sm:$0xc] %vm3, %v2
    %s7 = scalar_lea.vmem [#allocation0], 4294967266
    %8 = vst.msk [vmem:[%s7] ss:$8 sm:$0x30] %vm3, %v2
    %s9 = scalar_lea.vmem [#allocation0], 4294967251
    %10 = vst.msk [vmem:[%s9] ss:$8 sm:$0xc0] %vm3, %v2
    %s11 = scalar_lea.vmem %s0, 3
    %v12 = vld [vmem:[%s11] ss:$8 sm:$0xf]
    %s13 = scalar_lea.vmem %s0, 4294967271
    %v14 = vld [vmem:[%s13] ss:$8 sm:$0xf0]
    %vm15 = vcmask 1047556
    %v16 = vsel %vm15, %v14, %v12
    %17 = vrot.lane.b32.xlu0 %v16, 96
    %v18 = vpop.permute.xlu0 %17
    %vm19 = vcmask 1048320
    %20 = vst.msk [vmem:[#allocation0] sm:$0xf] %vm19, %v18
    %s21 = scalar_lea.vmem [#allocation0], 4
    %22 = vst.msk [vmem:[%s21] sm:$0xf0] %vm19, %v18
    %s23 = scalar_lea.vmem %s0, 2
    %v24 = vld [vmem:[%s23] ss:$8 sm:$0xf]
    %s25 = scalar_lea.vmem %s0, 4294967270
    %v26 = vld [vmem:[%s25] ss:$8 sm:$0xf0]
    %vm27 = vcmask 1047556
    %v28 = vsel %vm27, %v26, %v24
    %29 = vrot.lane.b32.xlu0 %v28, 64
    %v30 = vpop.permute.xlu0 %29
    %vm31 = vcmask 785920
    %32 = vst.msk [vmem:[#allocation0] sm:$0xf] %vm31, %v30
    %s33 = scalar_lea.vmem [#allocation0], 4
    %34 = vst.msk [vmem:[%s33] sm:$0xf0] %vm31, %v30
    %s35 = scalar_lea.vmem %s0, 1
    %v36 = vld [vmem:[%s35] ss:$8 sm:$0xf]
    %s37 = scalar_lea.vmem %s0, 4294967269
    %v38 = vld [vmem:[%s37] ss:$8 sm:$0xf0]
    %vm39 = vcmask 1047556
    %v40 = vsel %vm39, %v38, %v36
    %41 = vrot.lane.b32.xlu0 %v40, 32
    %v42 = vpop.permute.xlu0 %41
    %vm43 = vcmask 523520
    %44 = vst.msk [vmem:[#allocation0] sm:$0xf] %vm43, %v42
    %s45 = scalar_lea.vmem [#allocation0], 4
    %46 = vst.msk [vmem:[%s45] sm:$0xf0] %vm43, %v42
    %s48 = ssub.s32 16, 1
    %v49 = vld [vmem:[#allocation0] sm:%s48]
    %s51 = ssub.s32 16, 1
    %52 = vst [vmem:[%s1] sm:%s51] %v49
    %s53 = scalar_lea.vmem [#allocation0], 8
    %v54 = vld [vmem:[%s53] sm:%s48]
    %s56 = ssub.s32 16, 1
    %s57 = scalar_lea.vmem %s1, 4
    %58 = vst [vmem:[%s57] sm:%s56] %v54

// kernel: mamba_language_model.3
$region0: #{mamba_language_model.3}
  #allocation0 [shape = 'u32[]', space=smem, size = 0x4, offset = 0x4, fixed_abs, tag = 'smem constant byte address 0x4 - core index']
  #allocation1 [shape = 'u32[72,128]{1,0:T(1,128)}', space=vmem, size = 0x9000, scoped, tag = 'internal scratch']
  %s0 = inlined_call_operand.vmem [shape: bf16[48,16], index: 0, kind: input, shape index: {}]
  %s1 = inlined_call_operand.vmem [shape: bf16[16,256], index: 1, kind: input, shape index: {}]
  %s2 = inlined_call_operand.vmem [shape: f32[1,256], index: 2, kind: input, shape index: {}]
  %s3 = inlined_call_operand.hbm [shape: f32[48,256], index: 3, kind: output, shape index: {}]
  %s4 = sld [smem:[#allocation0]]
  $region22: #{mamba_language_model.3} parent=0
    _
  %s6 = ssub.s32 1, %s4
  %s7 = scalar_select 0, %s6, %s4
  $region1: #{mamba_language_model.3} parent=0
    #allocation2 [shape = 'u8[49152]{0}', space=vmem, size = 0xc000, scoped, tag = 'output window, operand 0, single buffered']
    #allocation3 [shape = 's32[1]{0}', space=sflag, size = 0x4, scoped, tag = 'scoped memory for mamba_language_model.3']
    %8 = vsyncpa [#allocation3], 0
    // Predicated region
    $region2: #{mamba_language_model.3} parent=1 // pred_check
      _
    $region3: #{mamba_language_model.3} parent=1 // pred_check_branch
      %10 = sbr.rel (0) target = $region5
    $region4: #{mamba_language_model.3} parent=1 // pred_region
      _
    $region5: #{mamba_language_model.3} parent=1 // pred_fallthru
      _
    // Predicated region
    $region6: #{mamba_language_model.3} parent=1 // pred_check
      _
    $region7: #{mamba_language_model.3} parent=1 // pred_check_branch
      %12 = sbr.rel (0) target = $region9
    $region8: #{mamba_language_model.3} parent=1 // pred_region
      _
    $region9: #{mamba_language_model.3} parent=1 // pred_fallthru
      _
    // Predicated region
    $region10: #{mamba_language_model.3} parent=1 // pred_check
      _
    $region11: #{mamba_language_model.3} parent=1 // pred_check_branch
      %14 = sbr.rel (0) target = $region13
    $region12: #{mamba_language_model.3} parent=1 // pred_region
      _
    $region13: #{mamba_language_model.3} parent=1 // pred_fallthru
      _
    %v16 = vld [vmem:[%s0] sm:$0xf]
    %v17 = vld [vmem:[%s0 + $0x4] sm:$0xf]
    %v18 = vld [vmem:[%s0 + $0x8] sm:$0xf]
    %v19 = vld [vmem:[%s0 + $0xc] sm:$0xf]
    %v20 = vld [vmem:[%s0 + $0x10] sm:$0xf]
    %v21 = vld [vmem:[%s0 + $0x14] sm:$0xf]
    %v22 = vld [vmem:[%s1] sm:$0xff]
    %v23 = vld [vmem:[%s1 + $0x8] sm:$0xff]
    %v24 = vld [vmem:[%s2] sm:$0x3]
    %v26 = vperm.slane %v24, 0
    %v27 = vperm.slane %v24, 1
    %v36 = vunpack.c.l.b16 %v16
    %v37 = vunpack.c.l.b16 %v17
    %v38 = vunpack.c.l.b16 %v18
    %v39 = vunpack.c.l.b16 %v19
    %v40 = vunpack.c.l.b16 %v20
    %v41 = vunpack.c.l.b16 %v21
    %v42 = vpack.c.b16 %v37, %v36
    %v43 = vpack.c.b16 %v39, %v38
    %v44 = vpack.c.b16 %v41, %v40
    %v47 = vunpack.c.l.b16 %v22
    %v48 = vunpack.c.h.b16 %v22
    %v49 = vunpack.c.l.b16 %v23
    %v50 = vunpack.c.h.b16 %v23
    %v51 = vpack.c.b16 %v49, %v47
    %v52 = vpack.c.b16 %v50, %v48
    %vm55 = vcmask 130048
    %v57 = vsel %vm55, %v42, 0
    %v60 = vsel %vm55, %v43, 0
    %v63 = vsel %vm55, %v44, 0
    %65 = vmatpush.bf16.msra.mxu0 0
    %66 = vmatpush.bf16.msra.mxu0 0
    %67 = vmatpush.bf16.msra.mxu0 0
    %68 = vmatpush.bf16.msra.mxu0 0
    %69 = vmatpush.bf16.msra.mxu0 0
    %70 = vmatpush.bf16.msra.mxu0 0
    %71 = vmatpush.bf16.msra.mxu0 0
    %72 = vmatpush.bf16.msra.mxu0 %v51
    %73 = vmatmul.bf16.gmra.mxu0 %v57
    %v74 = vpop.f32.mrf.mxu0
    %v75 = vadd.f32 %v26, %v74
    %v76 = vpop.f32.mrf.mxu0
    %v77 = vadd.f32 %v26, %v76
    %78 = vmatmul.bf16.gmra.mxu0 %v60
    %v79 = vpop.f32.mrf.mxu0
    %v80 = vadd.f32 %v26, %v79
    %v81 = vpop.f32.mrf.mxu0
    %v82 = vadd.f32 %v26, %v81
    %83 = vmatmul.bf16.gmra.mxu0 %v63
    %v84 = vpop.f32.mrf.mxu0
    %v85 = vadd.f32 %v26, %v84
    %v86 = vpop.f32.mrf.mxu0
    %v87 = vadd.f32 %v26, %v86
    %88 = vdwg.mxu0
    %89 = vmatpush.bf16.msra.mxu0 0
    %90 = vmatpush.bf16.msra.mxu0 0
    %91 = vmatpush.bf16.msra.mxu0 0
    %92 = vmatpush.bf16.msra.mxu0 0
    %93 = vmatpush.bf16.msra.mxu0 0
    %94 = vmatpush.bf16.msra.mxu0 0
    %95 = vmatpush.bf16.msra.mxu0 0
    %96 = vmatpush.bf16.msra.mxu0 %v52
    %97 = vmatmul.bf16.gmra.mxu0 %v57
    %v98 = vpop.f32.mrf.mxu0
    %v99 = vadd.f32 %v27, %v98
    %v100 = vpop.f32.mrf.mxu0
    %v101 = vadd.f32 %v27, %v100
    %102 = vmatmul.bf16.gmra.mxu0 %v60
    %v103 = vpop.f32.mrf.mxu0
    %v104 = vadd.f32 %v27, %v103
    %v105 = vpop.f32.mrf.mxu0
    %v106 = vadd.f32 %v27, %v105
    %107 = vmatmul.bf16.gmra.mxu0 %v63
    %v108 = vpop.f32.mrf.mxu0
    %v109 = vadd.f32 %v27, %v108
    %v110 = vpop.f32.mrf.mxu0
    %v111 = vadd.f32 %v27, %v110
    %112 = vdwg.mxu0
    %113 = vst [vmem:[#allocation2] sm:$0xff] %v75
    %114 = vst [vmem:[#allocation2 + $0x8] sm:$0xff] %v99
    %115 = vst [vmem:[#allocation2 + $0x10] sm:$0xff] %v77
    %116 = vst [vmem:[#allocation2 + $0x18] sm:$0xff] %v101
    %117 = vst [vmem:[#allocation2 + $0x20] sm:$0xff] %v80
    %118 = vst [vmem:[#allocation2 + $0x28] sm:$0xff] %v104
    %119 = vst [vmem:[#allocation2 + $0x30] sm:$0xff] %v82
    %120 = vst [vmem:[#allocation2 + $0x38] sm:$0xff] %v106
    %121 = vst [vmem:[#allocation2 + $0x40] sm:$0xff] %v85
    %122 = vst [vmem:[#allocation2 + $0x48] sm:$0xff] %v109
    %123 = vst [vmem:[#allocation2 + $0x50] sm:$0xff] %v87
    %124 = vst [vmem:[#allocation2 + $0x58] sm:$0xff] %v111
    // Predicated region
    $region14: #{mamba_language_model.3} parent=1 // pred_check
      _
    $region15: #{mamba_language_model.3} parent=1 // pred_check_branch
      %126 = sbr.rel (0) target = $region17
    $region16: #{mamba_language_model.3} parent=1 // pred_region
      %128 = vsyncadd [#allocation3], 0
      %s129 = sshll.u32 [#allocation2], 4
      %s130 = int_to_ptr.vmem [resolvable:$true] %s129
      %s131 = sshll.u32 %s3, 4
      %s132 = int_to_ptr.hbm [resolvable:$true] %s131
      %137 = dma.vmem_to_hbm [thread:$0]  %s130, 1536, %s132, [#allocation3], 256, 256, 16
    $region17: #{mamba_language_model.3} parent=1 // pred_fallthru
      _
    // Predicated region
    $region18: #{mamba_language_model.3} parent=1 // pred_check
      _
    $region19: #{mamba_language_model.3} parent=1 // pred_check_branch
      %139 = sbr.rel (0) target = $region21
    $region20: #{mamba_language_model.3} parent=1 // pred_region
      %141 = dma.done [#allocation3], 1536
    $region21: #{mamba_language_model.3} parent=1 // pred_fallthru
      _
    %142 = vsyncpa [#allocation3], 1

// kernel: mamba_language_model.2
$region0: #{mamba_language_model.2}
  #allocation0 [shape = 'u32[]', space=smem, size = 0x4, offset = 0x4, fixed_abs, tag = 'smem constant byte address 0x4 - core index']
  #allocation1 [shape = 'u32[72,128]{1,0:T(1,128)}', space=vmem, size = 0x9000, scoped, tag = 'internal scratch']
  %s0 = inlined_call_operand.vmem [shape: bf16[1,8,128], index: 0, kind: input, shape index: {}]
  %s1 = inlined_call_operand.vmem [shape: bf16[128,256], index: 1, kind: input, shape index: {}]
  %s2 = inlined_call_operand.vmem [shape: bf16[128,256], index: 2, kind: input, shape index: {}]
  %s3 = inlined_call_operand.vmem [shape: f32[4,256], index: 3, kind: input, shape index: {}]
  %s4 = inlined_call_operand.vmem [shape: f32[1,256], index: 4, kind: input, shape index: {}]
  %s5 = inlined_call_operand.vmem [shape: bf16[256,256], index: 5, kind: input, shape index: {}]
  %s6 = inlined_call_operand.vmem [shape: f32[1,256], index: 6, kind: input, shape index: {}]
  %s7 = inlined_call_operand.vmem [shape: f32[16,256], index: 7, kind: input, shape index: {}]
  %s8 = inlined_call_operand.vmem [shape: f32[16,256], index: 8, kind: input, shape index: {}]
  %s9 = inlined_call_operand.vmem [shape: f32[256,256], index: 9, kind: input, shape index: {}]
  %s10 = inlined_call_operand.vmem [shape: f32[16,256], index: 10, kind: input, shape index: {}]
  %s11 = inlined_call_operand.vmem [shape: f32[1,256], index: 11, kind: input, shape index: {}]
  %s12 = inlined_call_operand.vmem [shape: bf16[256,128], index: 12, kind: input, shape index: {}]
  %s13 = inlined_call_operand.vmem [shape: bf16[1,8,128], index: 13, kind: output, shape index: {}]
  %s14 = sld [smem:[#allocation0]]
  $region62: #{mamba_language_model.2} parent=0
    _
  %s16 = ssub.s32 1, %s14
  %s17 = scalar_select 0, %s16, %s14
  // Predicated region
  $region2: #{mamba_language_model.2} parent=0 // pred_check
    _
  $region3: #{mamba_language_model.2} parent=0 // pred_check_branch
    %19 = sbr.rel (0) target = $region5
  $region4: #{mamba_language_model.2} parent=0 // pred_region
    _
  $region5: #{mamba_language_model.2} parent=0 // pred_fallthru
    _
  // Predicated region
  $region6: #{mamba_language_model.2} parent=0 // pred_check
    _
  $region7: #{mamba_language_model.2} parent=0 // pred_check_branch
    %21 = sbr.rel (0) target = $region9
  $region8: #{mamba_language_model.2} parent=0 // pred_region
    _
  $region9: #{mamba_language_model.2} parent=0 // pred_fallthru
    _
  // Predicated region
  $region10: #{mamba_language_model.2} parent=0 // pred_check
    _
  $region11: #{mamba_language_model.2} parent=0 // pred_check_branch
    %23 = sbr.rel (0) target = $region13
  $region12: #{mamba_language_model.2} parent=0 // pred_region
    _
  $region13: #{mamba_language_model.2} parent=0 // pred_fallthru
    _
  // Predicated region
  $region14: #{mamba_language_model.2} parent=0 // pred_check
    _
  $region15: #{mamba_language_model.2} parent=0 // pred_check_branch
    %25 = sbr.rel (0) target = $region17
  $region16: #{mamba_language_model.2} parent=0 // pred_region
    _
  $region17: #{mamba_language_model.2} parent=0 // pred_fallthru
    _
  // Predicated region
  $region18: #{mamba_language_model.2} parent=0 // pred_check
    _
  $region19: #{mamba_language_model.2} parent=0 // pred_check_branch
    %27 = sbr.rel (0) target = $region21
  $region20: #{mamba_language_model.2} parent=0 // pred_region
    _
  $region21: #{mamba_language_model.2} parent=0 // pred_fallthru
    _
  // Predicated region
  $region22: #{mamba_language_model.2} parent=0 // pred_check
    _
  $region23: #{mamba_language_model.2} parent=0 // pred_check_branch
    %29 = sbr.rel (0) target = $region25
  $region24: #{mamba_language_model.2} parent=0 // pred_region
    _
  $region25: #{mamba_language_model.2} parent=0 // pred_fallthru
    _
  // Predicated region
  $region26: #{mamba_language_model.2} parent=0 // pred_check
    _
  $region27: #{mamba_language_model.2} parent=0 // pred_check_branch
    %31 = sbr.rel (0) target = $region29
  $region28: #{mamba_language_model.2} parent=0 // pred_region
    _
  $region29: #{mamba_language_model.2} parent=0 // pred_fallthru
    _
  // Predicated region
  $region30: #{mamba_language_model.2} parent=0 // pred_check
    _
  $region31: #{mamba_language_model.2} parent=0 // pred_check_branch
    %33 = sbr.rel (0) target = $region33
  $region32: #{mamba_language_model.2} parent=0 // pred_region
    _
  $region33: #{mamba_language_model.2} parent=0 // pred_fallthru
    _
  // Predicated region
  $region34: #{mamba_language_model.2} parent=0 // pred_check
    _
  $region35: #{mamba_language_model.2} parent=0 // pred_check_branch
    %35 = sbr.rel (0) target = $region37
  $region36: #{mamba_language_model.2} parent=0 // pred_region
    _
  $region37: #{mamba_language_model.2} parent=0 // pred_fallthru
    _
  // Predicated region
  $region38: #{mamba_language_model.2} parent=0 // pred_check
    _
  $region39: #{mamba_language_model.2} parent=0 // pred_check_branch
    %37 = sbr.rel (0) target = $region41
  $region40: #{mamba_language_model.2} parent=0 // pred_region
    _
  $region41: #{mamba_language_model.2} parent=0 // pred_fallthru
    _
  // Predicated region
  $region42: #{mamba_language_model.2} parent=0 // pred_check
    _
  $region43: #{mamba_language_model.2} parent=0 // pred_check_branch
    %39 = sbr.rel (0) target = $region45
  $region44: #{mamba_language_model.2} parent=0 // pred_region
    _
  $region45: #{mamba_language_model.2} parent=0 // pred_fallthru
    _
  // Predicated region
  $region46: #{mamba_language_model.2} parent=0 // pred_check
    _
  $region47: #{mamba_language_model.2} parent=0 // pred_check_branch
    %41 = sbr.rel (0) target = $region49
  $region48: #{mamba_language_model.2} parent=0 // pred_region
    _
  $region49: #{mamba_language_model.2} parent=0 // pred_fallthru
    _
  // Predicated region
  $region50: #{mamba_language_model.2} parent=0 // pred_check
    _
  $region51: #{mamba_language_model.2} parent=0 // pred_check_branch
    %43 = sbr.rel (0) target = $region53
  $region52: #{mamba_language_model.2} parent=0 // pred_region
    _
  $region53: #{mamba_language_model.2} parent=0 // pred_fallthru
    _
  %v44 = vld [vmem:[%s0] sm:$0xf]
  %v45 = vld [vmem:[%s1] sm:$0xff]
  %v46 = vld [vmem:[%s1 + $0x8] sm:$0xff]
  %v47 = vld [vmem:[%s1 + $0x10] sm:$0xff]
  %v48 = vld [vmem:[%s1 + $0x18] sm:$0xff]
  %v49 = vld [vmem:[%s1 + $0x20] sm:$0xff]
  %v50 = vld [vmem:[%s1 + $0x28] sm:$0xff]
  %v51 = vld [vmem:[%s1 + $0x30] sm:$0xff]
  %v52 = vld [vmem:[%s1 + $0x38] sm:$0xff]
  %v53 = vld [vmem:[%s1 + $0x40] sm:$0xff]
  %v54 = vld [vmem:[%s1 + $0x48] sm:$0xff]
  %v55 = vld [vmem:[%s1 + $0x50] sm:$0xff]
  %v56 = vld [vmem:[%s1 + $0x58] sm:$0xff]
  %v57 = vld [vmem:[%s1 + $0x60] sm:$0xff]
  %v58 = vld [vmem:[%s1 + $0x68] sm:$0xff]
  %v59 = vld [vmem:[%s1 + $0x70] sm:$0xff]
  %v60 = vld [vmem:[%s1 + $0x78] sm:$0xff]
  %v77 = vunpack.c.l.b16 %v45
  %v78 = vunpack.c.h.b16 %v45
  %v79 = vunpack.c.l.b16 %v46
  %v80 = vunpack.c.h.b16 %v46
  %v81 = vunpack.c.l.b16 %v47
  %v82 = vunpack.c.h.b16 %v47
  %v83 = vunpack.c.l.b16 %v48
  %v84 = vunpack.c.h.b16 %v48
  %v85 = vunpack.c.l.b16 %v49
  %v86 = vunpack.c.h.b16 %v49
  %v87 = vunpack.c.l.b16 %v50
  %v88 = vunpack.c.h.b16 %v50
  %v89 = vunpack.c.l.b16 %v51
  %v90 = vunpack.c.h.b16 %v51
  %v91 = vunpack.c.l.b16 %v52
  %v92 = vunpack.c.h.b16 %v52
  %v93 = vunpack.c.l.b16 %v53
  %v94 = vunpack.c.h.b16 %v53
  %v95 = vunpack.c.l.b16 %v54
  %v96 = vunpack.c.h.b16 %v54
  %v97 = vunpack.c.l.b16 %v55
  %v98 = vunpack.c.h.b16 %v55
  %v99 = vunpack.c.l.b16 %v56
  %v100 = vunpack.c.h.b16 %v56
  %v101 = vunpack.c.l.b16 %v57
  %v102 = vunpack.c.h.b16 %v57
  %v103 = vunpack.c.l.b16 %v58
  %v104 = vunpack.c.h.b16 %v58
  %v105 = vunpack.c.l.b16 %v59
  %v106 = vunpack.c.h.b16 %v59
  %v107 = vunpack.c.l.b16 %v60
  %v108 = vunpack.c.h.b16 %v60
  %v109 = vpack.c.b16 %v79, %v77
  %v110 = vpack.c.b16 %v80, %v78
  %v111 = vpack.c.b16 %v83, %v81
  %v112 = vpack.c.b16 %v84, %v82
  %v113 = vpack.c.b16 %v87, %v85
  %v114 = vpack.c.b16 %v88, %v86
  %v115 = vpack.c.b16 %v91, %v89
  %v116 = vpack.c.b16 %v92, %v90
  %v117 = vpack.c.b16 %v95, %v93
  %v118 = vpack.c.b16 %v96, %v94
  %v119 = vpack.c.b16 %v99, %v97
  %v120 = vpack.c.b16 %v100, %v98
  %v121 = vpack.c.b16 %v103, %v101
  %v122 = vpack.c.b16 %v104, %v102
  %v123 = vpack.c.b16 %v107, %v105
  %v124 = vpack.c.b16 %v108, %v106
  %141 = vmatpush.bf16.msra.mxu0 %v123
  %142 = vmatpush.bf16.msra.mxu0 %v121
  %143 = vmatpush.bf16.msra.mxu0 %v119
  %144 = vmatpush.bf16.msra.mxu0 %v117
  %145 = vmatpush.bf16.msra.mxu0 %v115
  %146 = vmatpush.bf16.msra.mxu0 %v113
  %147 = vmatpush.bf16.msra.mxu0 %v111
  %148 = vmatpush.bf16.msra.mxu0 %v109
  %149 = vmatmul.bf16.gmra.mxu0 %v44
  %v150 = vpop.f32.mrf.mxu0
  %v151 = vadd.f32 0.0, %v150
  %v152 = vpop.f32.mrf.mxu0
  %153 = vdwg.mxu0
  %154 = vmatpush.bf16.msra.mxu0 %v124
  %155 = vmatpush.bf16.msra.mxu0 %v122
  %156 = vmatpush.bf16.msra.mxu0 %v120
  %157 = vmatpush.bf16.msra.mxu0 %v118
  %158 = vmatpush.bf16.msra.mxu0 %v116
  %159 = vmatpush.bf16.msra.mxu0 %v114
  %160 = vmatpush.bf16.msra.mxu0 %v112
  %161 = vmatpush.bf16.msra.mxu0 %v110
  %162 = vmatmul.bf16.gmra.mxu0 %v44
  %v163 = vpop.f32.mrf.mxu0
  %v164 = vadd.f32 0.0, %v163
  %v165 = vpop.f32.mrf.mxu0
  %166 = vdwg.mxu0
  %v167 = vld [vmem:[%s2] sm:$0xff]
  %v168 = vld [vmem:[%s2 + $0x8] sm:$0xff]
  %v169 = vld [vmem:[%s2 + $0x10] sm:$0xff]
  %v170 = vld [vmem:[%s2 + $0x18] sm:$0xff]
  %v171 = vld [vmem:[%s2 + $0x20] sm:$0xff]
  %v172 = vld [vmem:[%s2 + $0x28] sm:$0xff]
  %v173 = vld [vmem:[%s2 + $0x30] sm:$0xff]
  %v174 = vld [vmem:[%s2 + $0x38] sm:$0xff]
  %v175 = vld [vmem:[%s2 + $0x40] sm:$0xff]
  %v176 = vld [vmem:[%s2 + $0x48] sm:$0xff]
  %v177 = vld [vmem:[%s2 + $0x50] sm:$0xff]
  %v178 = vld [vmem:[%s2 + $0x58] sm:$0xff]
  %v179 = vld [vmem:[%s2 + $0x60] sm:$0xff]
  %v180 = vld [vmem:[%s2 + $0x68] sm:$0xff]
  %v181 = vld [vmem:[%s2 + $0x70] sm:$0xff]
  %v182 = vld [vmem:[%s2 + $0x78] sm:$0xff]
  %v199 = vunpack.c.l.b16 %v167
  %v200 = vunpack.c.h.b16 %v167
  %v201 = vunpack.c.l.b16 %v168
  %v202 = vunpack.c.h.b16 %v168
  %v203 = vunpack.c.l.b16 %v169
  %v204 = vunpack.c.h.b16 %v169
  %v205 = vunpack.c.l.b16 %v170
  %v206 = vunpack.c.h.b16 %v170
  %v207 = vunpack.c.l.b16 %v171
  %v208 = vunpack.c.h.b16 %v171
  %v209 = vunpack.c.l.b16 %v172
  %v210 = vunpack.c.h.b16 %v172
  %v211 = vunpack.c.l.b16 %v173
  %v212 = vunpack.c.h.b16 %v173
  %v213 = vunpack.c.l.b16 %v174
  %v214 = vunpack.c.h.b16 %v174
  %v215 = vunpack.c.l.b16 %v175
  %v216 = vunpack.c.h.b16 %v175
  %v217 = vunpack.c.l.b16 %v176
  %v218 = vunpack.c.h.b16 %v176
  %v219 = vunpack.c.l.b16 %v177
  %v220 = vunpack.c.h.b16 %v177
  %v221 = vunpack.c.l.b16 %v178
  %v222 = vunpack.c.h.b16 %v178
  %v223 = vunpack.c.l.b16 %v179
  %v224 = vunpack.c.h.b16 %v179
  %v225 = vunpack.c.l.b16 %v180
  %v226 = vunpack.c.h.b16 %v180
  %v227 = vunpack.c.l.b16 %v181
  %v228 = vunpack.c.h.b16 %v181
  %v229 = vunpack.c.l.b16 %v182
  %v230 = vunpack.c.h.b16 %v182
  %v231 = vpack.c.b16 %v201, %v199
  %v232 = vpack.c.b16 %v202, %v200
  %v233 = vpack.c.b16 %v205, %v203
  %v234 = vpack.c.b16 %v206, %v204
  %v235 = vpack.c.b16 %v209, %v207
  %v236 = vpack.c.b16 %v210, %v208
  %v237 = vpack.c.b16 %v213, %v211
  %v238 = vpack.c.b16 %v214, %v212
  %v239 = vpack.c.b16 %v217, %v215
  %v240 = vpack.c.b16 %v218, %v216
  %v241 = vpack.c.b16 %v221, %v219
  %v242 = vpack.c.b16 %v222, %v220
  %v243 = vpack.c.b16 %v225, %v223
  %v244 = vpack.c.b16 %v226, %v224
  %v245 = vpack.c.b16 %v229, %v227
  %v246 = vpack.c.b16 %v230, %v228
  %263 = vmatpush.bf16.msra.mxu0 %v245
  %264 = vmatpush.bf16.msra.mxu0 %v243
  %265 = vmatpush.bf16.msra.mxu0 %v241
  %266 = vmatpush.bf16.msra.mxu0 %v239
  %267 = vmatpush.bf16.msra.mxu0 %v237
  %268 = vmatpush.bf16.msra.mxu0 %v235
  %269 = vmatpush.bf16.msra.mxu0 %v233
  %270 = vmatpush.bf16.msra.mxu0 %v231
  %271 = vmatmul.bf16.gmra.mxu0 %v44
  %v272 = vpop.f32.mrf.mxu0
  %v273 = vadd.f32 0.0, %v272
  %v274 = vpop.f32.mrf.mxu0
  %275 = vdwg.mxu0
  %276 = vmatpush.bf16.msra.mxu0 %v246
  %277 = vmatpush.bf16.msra.mxu0 %v244
  %278 = vmatpush.bf16.msra.mxu0 %v242
  %279 = vmatpush.bf16.msra.mxu0 %v240
  %280 = vmatpush.bf16.msra.mxu0 %v238
  %281 = vmatpush.bf16.msra.mxu0 %v236
  %282 = vmatpush.bf16.msra.mxu0 %v234
  %283 = vmatpush.bf16.msra.mxu0 %v232
  %284 = vmatmul.bf16.gmra.mxu0 %v44
  %v285 = vpop.f32.mrf.mxu0
  %v286 = vadd.f32 0.0, %v285
  %v287 = vpop.f32.mrf.mxu0
  %288 = vdwg.mxu0
  %v289 = vld [vmem:[%s3] sm:$0xff]
  %v292 = vrot.slane %v151, 5
  %v293 = vrot.slane %v164, 5
  %vm296 = vcmask 1042432
  %v297 = vsel %vm296, 0.0, %v292
  %v298 = vsel %vm296, 0.0, %v293
  %v299 = vld [vmem:[%s4] sm:$0x3]
  %v301 = vperm.slane %v299, 0
  %v302 = vperm.slane %v299, 1
  %v306 = vperm.slane %v289, 0
  %v307 = vperm.slane %v289, 4
  %v310 = vperm.slane %v306, 0
  %v311 = vperm.slane %v307, 0
  %v312 = vmul.f32 %v310, %v297
  %v313 = vmul.f32 %v311, %v298
  %v314 = vadd.f32 %v301, %v312
  %v315 = vadd.f32 %v302, %v313
  %v316 = vperm.slane %v289, 1
  %v317 = vperm.slane %v289, 5
  %v320 = vperm.slane %v316, 1
  %v321 = vperm.slane %v317, 1
  %v322 = vmul.f32 %v320, %v297
  %v323 = vmul.f32 %v321, %v298
  %v324 = vmul.f32 %v320, %v292
  %v325 = vmul.f32 %v321, %v293
  %vm330 = vcmask 1046528
  %v331 = vrot.slane %v322, 1
  %v332 = vrot.slane %v324, 1
  %v333 = vsel %vm330, %v331, %v332
  %v334 = vrot.slane %v323, 1
  %v335 = vrot.slane %v325, 1
  %v336 = vsel %vm330, %v334, %v335
  %v339 = vadd.f32 %v314, %v333
  %v340 = vadd.f32 %v315, %v336
  %v341 = vperm.slane %v289, 2
  %v342 = vperm.slane %v289, 6
  %v345 = vperm.slane %v341, 2
  %v346 = vperm.slane %v342, 2
  %v347 = vmul.f32 %v345, %v297
  %v348 = vmul.f32 %v346, %v298
  %v349 = vmul.f32 %v345, %v292
  %v350 = vmul.f32 %v346, %v293
  %vm355 = vcmask 1045504
  %v356 = vrot.slane %v347, 2
  %v357 = vrot.slane %v349, 2
  %v358 = vsel %vm355, %v356, %v357
  %v359 = vrot.slane %v348, 2
  %v360 = vrot.slane %v350, 2
  %v361 = vsel %vm355, %v359, %v360
  %v364 = vadd.f32 %v339, %v358
  %v365 = vadd.f32 %v340, %v361
  %v366 = vperm.slane %v289, 3
  %v367 = vperm.slane %v289, 7
  %v370 = vperm.slane %v366, 3
  %v371 = vperm.slane %v367, 3
  %v372 = vmul.f32 %v370, %v297
  %v373 = vmul.f32 %v371, %v298
  %v374 = vmul.f32 %v370, %v292
  %v375 = vmul.f32 %v371, %v293
  %vm380 = vcmask 1044480
  %v381 = vrot.slane %v372, 3
  %v382 = vrot.slane %v374, 3
  %v383 = vsel %vm380, %v381, %v382
  %v384 = vrot.slane %v373, 3
  %v385 = vrot.slane %v375, 3
  %v386 = vsel %vm380, %v384, %v385
  %v389 = vadd.f32 %v364, %v383
  %v390 = vadd.f32 %v365, %v386
  %v391 = vsub.f32 0.0, %v389
  %v392 = vsub.f32 0.0, %v390
  %v393 = vmul.f32 %v391, 1.442695
  %v394 = vpow.pop %v393
  %v395 = vmul.f32 %v392, 1.442695
  %v396 = vpow.pop %v395
  %v397 = vadd.f32 %v394, 1.0
  %v398 = vadd.f32 %v396, 1.0
  %v399 = vrcp.pop %v397
  %v400 = vmul.f32 %v397, %v399
  %v401 = vsub.f32 1.0, %v400
  %v402 = vmul.f32 %v399, %v401
  %v403 = vadd.f32 %v399, %v402
  %vm404 = vweird.f32 %v397
  %vm405 = vweird.f32 %v399
  %vm406 = vmor %vm404, %vm405
  %v407 = vsel %vm406, %v399, %v403
  %v408 = vand.u32 2147483647, %v397
  %vm409 = vcmp.eq.f32.partialorder %v408, 8.507059e+37
  %v410 = vand.u32 %v397, 2147483648
  %v411 = vor.u32 1.1754944e-38, %v410
  %v412 = vsel %vm409, %v411, %v407
  %v413 = vmul.f32 %v389, %v412
  %v414 = vrcp.pop %v398
  %v415 = vmul.f32 %v398, %v414
  %v416 = vsub.f32 1.0, %v415
  %v417 = vmul.f32 %v414, %v416
  %v418 = vadd.f32 %v414, %v417
  %vm419 = vweird.f32 %v398
  %vm420 = vweird.f32 %v414
  %vm421 = vmor %vm419, %vm420
  %v422 = vsel %vm421, %v414, %v418
  %v423 = vand.u32 2147483647, %v398
  %vm424 = vcmp.eq.f32.partialorder %v423, 8.507059e+37
  %v425 = vand.u32 %v398, 2147483648
  %v426 = vor.u32 1.1754944e-38, %v425
  %v427 = vsel %vm424, %v426, %v422
  %v428 = vmul.f32 %v390, %v427
  %v429 = vpack.c.bf16 %v413, %v413
  %v430 = vpack.c.bf16 %v428, %v428
  %v431 = vld [vmem:[%s5] sm:$0xff]
  %v432 = vld [vmem:[%s5 + $0x8] sm:$0xff]
  %v433 = vld [vmem:[%s5 + $0x10] sm:$0xff]
  %v434 = vld [vmem:[%s5 + $0x18] sm:$0xff]
  %v435 = vld [vmem:[%s5 + $0x20] sm:$0xff]
  %v436 = vld [vmem:[%s5 + $0x28] sm:$0xff]
  %v437 = vld [vmem:[%s5 + $0x30] sm:$0xff]
  %v438 = vld [vmem:[%s5 + $0x38] sm:$0xff]
  %v439 = vld [vmem:[%s5 + $0x40] sm:$0xff]
  %v440 = vld [vmem:[%s5 + $0x48] sm:$0xff]
  %v441 = vld [vmem:[%s5 + $0x50] sm:$0xff]
  %v442 = vld [vmem:[%s5 + $0x58] sm:$0xff]
  %v443 = vld [vmem:[%s5 + $0x60] sm:$0xff]
  %v444 = vld [vmem:[%s5 + $0x68] sm:$0xff]
  %v445 = vld [vmem:[%s5 + $0x70] sm:$0xff]
  %v446 = vld [vmem:[%s5 + $0x78] sm:$0xff]
  %v447 = vld [vmem:[%s5 + $0x80] sm:$0xff]
  %v448 = vld [vmem:[%s5 + $0x88] sm:$0xff]
  %v449 = vld [vmem:[%s5 + $0x90] sm:$0xff]
  %v450 = vld [vmem:[%s5 + $0x98] sm:$0xff]
  %v451 = vld [vmem:[%s5 + $0xa0] sm:$0xff]
  %v452 = vld [vmem:[%s5 + $0xa8] sm:$0xff]
  %v453 = vld [vmem:[%s5 + $0xb0] sm:$0xff]
  %v454 = vld [vmem:[%s5 + $0xb8] sm:$0xff]
  %v455 = vld [vmem:[%s5 + $0xc0] sm:$0xff]
  %v456 = vld [vmem:[%s5 + $0xc8] sm:$0xff]
  %v457 = vld [vmem:[%s5 + $0xd0] sm:$0xff]
  %v458 = vld [vmem:[%s5 + $0xd8] sm:$0xff]
  %v459 = vld [vmem:[%s5 + $0xe0] sm:$0xff]
  %v460 = vld [vmem:[%s5 + $0xe8] sm:$0xff]
  %v461 = vld [vmem:[%s5 + $0xf0] sm:$0xff]
  %v462 = vld [vmem:[%s5 + $0xf8] sm:$0xff]
  %v463 = vld [vmem:[%s6] sm:$0x3]
  %v465 = vperm.slane %v463, 0
  %v466 = vperm.slane %v463, 1
  %v501 = vunpack.c.l.b16 %v431
  %v502 = vunpack.c.h.b16 %v431
  %v503 = vunpack.c.l.b16 %v432
  %v504 = vunpack.c.h.b16 %v432
  %v505 = vunpack.c.l.b16 %v433
  %v506 = vunpack.c.h.b16 %v433
  %v507 = vunpack.c.l.b16 %v434
  %v508 = vunpack.c.h.b16 %v434
  %v509 = vunpack.c.l.b16 %v435
  %v510 = vunpack.c.h.b16 %v435
  %v511 = vunpack.c.l.b16 %v436
  %v512 = vunpack.c.h.b16 %v436
  %v513 = vunpack.c.l.b16 %v437
  %v514 = vunpack.c.h.b16 %v437
  %v515 = vunpack.c.l.b16 %v438
  %v516 = vunpack.c.h.b16 %v438
  %v517 = vunpack.c.l.b16 %v439
  %v518 = vunpack.c.h.b16 %v439
  %v519 = vunpack.c.l.b16 %v440
  %v520 = vunpack.c.h.b16 %v440
  %v521 = vunpack.c.l.b16 %v441
  %v522 = vunpack.c.h.b16 %v441
  %v523 = vunpack.c.l.b16 %v442
  %v524 = vunpack.c.h.b16 %v442
  %v525 = vunpack.c.l.b16 %v443
  %v526 = vunpack.c.h.b16 %v443
  %v527 = vunpack.c.l.b16 %v444
  %v528 = vunpack.c.h.b16 %v444
  %v529 = vunpack.c.l.b16 %v445
  %v530 = vunpack.c.h.b16 %v445
  %v531 = vunpack.c.l.b16 %v446
  %v532 = vunpack.c.h.b16 %v446
  %v533 = vunpack.c.l.b16 %v447
  %v534 = vunpack.c.h.b16 %v447
  %v535 = vunpack.c.l.b16 %v448
  %v536 = vunpack.c.h.b16 %v448
  %v537 = vunpack.c.l.b16 %v449
  %v538 = vunpack.c.h.b16 %v449
  %v539 = vunpack.c.l.b16 %v450
  %v540 = vunpack.c.h.b16 %v450
  %v541 = vunpack.c.l.b16 %v451
  %v542 = vunpack.c.h.b16 %v451
  %v543 = vunpack.c.l.b16 %v452
  %v544 = vunpack.c.h.b16 %v452
  %v545 = vunpack.c.l.b16 %v453
  %v546 = vunpack.c.h.b16 %v453
  %v547 = vunpack.c.l.b16 %v454
  %v548 = vunpack.c.h.b16 %v454
  %v549 = vunpack.c.l.b16 %v455
  %v550 = vunpack.c.h.b16 %v455
  %v551 = vunpack.c.l.b16 %v456
  %v552 = vunpack.c.h.b16 %v456
  %v553 = vunpack.c.l.b16 %v457
  %v554 = vunpack.c.h.b16 %v457
  %v555 = vunpack.c.l.b16 %v458
  %v556 = vunpack.c.h.b16 %v458
  %v557 = vunpack.c.l.b16 %v459
  %v558 = vunpack.c.h.b16 %v459
  %v559 = vunpack.c.l.b16 %v460
  %v560 = vunpack.c.h.b16 %v460
  %v561 = vunpack.c.l.b16 %v461
  %v562 = vunpack.c.h.b16 %v461
  %v563 = vunpack.c.l.b16 %v462
  %v564 = vunpack.c.h.b16 %v462
  %v565 = vpack.c.b16 %v503, %v501
  %v566 = vpack.c.b16 %v504, %v502
  %v567 = vpack.c.b16 %v507, %v505
  %v568 = vpack.c.b16 %v508, %v506
  %v569 = vpack.c.b16 %v511, %v509
  %v570 = vpack.c.b16 %v512, %v510
  %v571 = vpack.c.b16 %v515, %v513
  %v572 = vpack.c.b16 %v516, %v514
  %v573 = vpack.c.b16 %v519, %v517
  %v574 = vpack.c.b16 %v520, %v518
  %v575 = vpack.c.b16 %v523, %v521
  %v576 = vpack.c.b16 %v524, %v522
  %v577 = vpack.c.b16 %v527, %v525
  %v578 = vpack.c.b16 %v528, %v526
  %v579 = vpack.c.b16 %v531, %v529
  %v580 = vpack.c.b16 %v532, %v530
  %v581 = vpack.c.b16 %v535, %v533
  %v582 = vpack.c.b16 %v536, %v534
  %v583 = vpack.c.b16 %v539, %v537
  %v584 = vpack.c.b16 %v540, %v538
  %v585 = vpack.c.b16 %v543, %v541
  %v586 = vpack.c.b16 %v544, %v542
  %v587 = vpack.c.b16 %v547, %v545
  %v588 = vpack.c.b16 %v548, %v546
  %v589 = vpack.c.b16 %v551, %v549
  %v590 = vpack.c.b16 %v552, %v550
  %v591 = vpack.c.b16 %v555, %v553
  %v592 = vpack.c.b16 %v556, %v554
  %v593 = vpack.c.b16 %v559, %v557
  %v594 = vpack.c.b16 %v560, %v558
  %v595 = vpack.c.b16 %v563, %v561
  %v596 = vpack.c.b16 %v564, %v562
  %629 = vmatpush.bf16.msra.mxu0 %v579
  %630 = vmatpush.bf16.msra.mxu0 %v577
  %631 = vmatpush.bf16.msra.mxu0 %v575
  %632 = vmatpush.bf16.msra.mxu0 %v573
  %633 = vmatpush.bf16.msra.mxu0 %v571
  %634 = vmatpush.bf16.msra.mxu0 %v569
  %635 = vmatpush.bf16.msra.mxu0 %v567
  %636 = vmatpush.bf16.msra.mxu0 %v565
  %637 = vmatmul.bf16.gmra.mxu0 %v429
  %v638 = vpop.f32.mrf.mxu0
  %v639 = vadd.f32 %v465, %v638
  %v640 = vpop.f32.mrf.mxu0
  %641 = vdwg.mxu0
  %642 = vmatpush.bf16.msra.mxu0 %v595
  %643 = vmatpush.bf16.msra.mxu0 %v593
  %644 = vmatpush.bf16.msra.mxu0 %v591
  %645 = vmatpush.bf16.msra.mxu0 %v589
  %646 = vmatpush.bf16.msra.mxu0 %v587
  %647 = vmatpush.bf16.msra.mxu0 %v585
  %648 = vmatpush.bf16.msra.mxu0 %v583
  %649 = vmatpush.bf16.msra.mxu0 %v581
  %650 = vmatmul.bf16.gmra.mxu0 %v430
  %v651 = vpop.f32.mrf.mxu0
  %v652 = vadd.f32 %v639, %v651
  %v653 = vpop.f32.mrf.mxu0
  %654 = vdwg.mxu0
  %655 = vmatpush.bf16.msra.mxu0 %v580
  %656 = vmatpush.bf16.msra.mxu0 %v578
  %657 = vmatpush.bf16.msra.mxu0 %v576
  %658 = vmatpush.bf16.msra.mxu0 %v574
  %659 = vmatpush.bf16.msra.mxu0 %v572
  %660 = vmatpush.bf16.msra.mxu0 %v570
  %661 = vmatpush.bf16.msra.mxu0 %v568
  %662 = vmatpush.bf16.msra.mxu0 %v566
  %663 = vmatmul.bf16.gmra.mxu0 %v429
  %v664 = vpop.f32.mrf.mxu0
  %v665 = vadd.f32 %v466, %v664
  %v666 = vpop.f32.mrf.mxu0
  %667 = vdwg.mxu0
  %668 = vmatpush.bf16.msra.mxu0 %v596
  %669 = vmatpush.bf16.msra.mxu0 %v594
  %670 = vmatpush.bf16.msra.mxu0 %v592
  %671 = vmatpush.bf16.msra.mxu0 %v590
  %672 = vmatpush.bf16.msra.mxu0 %v588
  %673 = vmatpush.bf16.msra.mxu0 %v586
  %674 = vmatpush.bf16.msra.mxu0 %v584
  %675 = vmatpush.bf16.msra.mxu0 %v582
  %676 = vmatmul.bf16.gmra.mxu0 %v430
  %v677 = vpop.f32.mrf.mxu0
  %v678 = vadd.f32 %v665, %v677
  %v679 = vpop.f32.mrf.mxu0
  %680 = vdwg.mxu0
  %vm681 = vcmp.gt.f32.partialorder %v652, 20.0
  %vm682 = vcmp.gt.f32.partialorder %v678, 20.0
  %v683 = vmin.f32 %v652, 20.0
  %v684 = vmin.f32 %v678, 20.0
  %v685 = vmul.f32 %v683, 1.442695
  %v686 = vpow.pop %v685
  %v687 = vmul.f32 %v684, 1.442695
  %v688 = vpow.pop %v687
  %v689 = vadd.f32 %v686, 1.0
  %v690 = vadd.f32 %v688, 1.0
  %v691 = vlog2.pop %v689
  %v692 = vmul.f32 %v691, 0.6931472
  %v693 = vlog2.pop %v690
  %v694 = vmul.f32 %v693, 0.6931472
  %v695 = vsel %vm681, %v652, %v692
  %v696 = vsel %vm682, %v678, %v694
  %v699 = vrot.slane %v428, 7
  %vm700 = vcmask 1040384
  %v701 = vsel %vm700, %v413, %v699
  %vm702 = vcmask 1041409
  %v703 = vsel %vm702, %v413, %v699
  %v704 = vrot.slane %v703, 1
  %vm705 = vcmask 1042434
  %v706 = vsel %vm705, %v413, %v699
  %v707 = vrot.slane %v706, 2
  %vm708 = vcmask 1043459
  %v709 = vsel %vm708, %v413, %v699
  %v710 = vrot.slane %v709, 3
  %vm711 = vcmask 1044484
  %v712 = vsel %vm711, %v413, %v699
  %v713 = vrot.slane %v712, 4
  %vm714 = vcmask 1045509
  %v715 = vsel %vm714, %v413, %v699
  %v716 = vrot.slane %v715, 5
  %vm717 = vcmask 1046534
  %v718 = vsel %vm717, %v413, %v699
  %v719 = vrot.slane %v718, 6
  %v720 = vsel %vm330, %v699, %v413
  %v721 = vrot.slane %v720, 7
  %v722 = vld [vmem:[%s7] sm:$0xff]
  %v723 = vld [vmem:[%s7 + $0x8] sm:$0xff]
  %v724 = vld [vmem:[%s7 + $0x10] sm:$0xff]
  %v725 = vld [vmem:[%s7 + $0x18] sm:$0xff]
  %v726 = vperm.slane %v701, 0
  %v727 = vperm.slane %v701, 1
  %v728 = vperm.slane %v704, 0
  %v729 = vperm.slane %v704, 1
  %v730 = vperm.slane %v707, 0
  %v731 = vperm.slane %v707, 1
  %v732 = vperm.slane %v710, 0
  %v733 = vperm.slane %v710, 1
  %v734 = vperm.slane %v713, 0
  %v735 = vperm.slane %v713, 1
  %v736 = vperm.slane %v716, 0
  %v737 = vperm.slane %v716, 1
  %v738 = vperm.slane %v719, 0
  %v739 = vperm.slane %v719, 1
  %v740 = vperm.slane %v721, 0
  %v741 = vperm.slane %v721, 1
  %v758 = vmul.f32 %v726, %v722
  %v759 = vmul.f32 %v727, %v723
  %v760 = vmul.f32 %v726, %v724
  %v761 = vmul.f32 %v727, %v725
  %v762 = vmul.f32 %v728, %v722
  %v763 = vmul.f32 %v729, %v723
  %v764 = vmul.f32 %v728, %v724
  %v765 = vmul.f32 %v729, %v725
  %v766 = vmul.f32 %v730, %v722
  %v767 = vmul.f32 %v731, %v723
  %v768 = vmul.f32 %v730, %v724
  %v769 = vmul.f32 %v731, %v725
  %v770 = vmul.f32 %v732, %v722
  %v771 = vmul.f32 %v733, %v723
  %v772 = vmul.f32 %v732, %v724
  %v773 = vmul.f32 %v733, %v725
  %v774 = vmul.f32 %v734, %v722
  %v775 = vmul.f32 %v735, %v723
  %v776 = vmul.f32 %v734, %v724
  %v777 = vmul.f32 %v735, %v725
  %v778 = vmul.f32 %v736, %v722
  %v779 = vmul.f32 %v737, %v723
  %v780 = vmul.f32 %v736, %v724
  %v781 = vmul.f32 %v737, %v725
  %v782 = vmul.f32 %v738, %v722
  %v783 = vmul.f32 %v739, %v723
  %v784 = vmul.f32 %v738, %v724
  %v785 = vmul.f32 %v739, %v725
  %v786 = vmul.f32 %v740, %v722
  %v787 = vmul.f32 %v741, %v723
  %v788 = vmul.f32 %v740, %v724
  %v789 = vmul.f32 %v741, %v725
  %v790 = vld [vmem:[%s8] sm:$0xff]
  %v791 = vld [vmem:[%s8 + $0x8] sm:$0xff]
  %v792 = vld [vmem:[%s8 + $0x10] sm:$0xff]
  %v793 = vld [vmem:[%s8 + $0x18] sm:$0xff]
  %v794 = vmul.f32 %v726, %v790
  %v795 = vmul.f32 %v727, %v791
  %v796 = vmul.f32 %v726, %v792
  %v797 = vmul.f32 %v727, %v793
  %v798 = vmul.f32 %v728, %v790
  %v799 = vmul.f32 %v729, %v791
  %v800 = vmul.f32 %v728, %v792
  %v801 = vmul.f32 %v729, %v793
  %v802 = vmul.f32 %v730, %v790
  %v803 = vmul.f32 %v731, %v791
  %v804 = vmul.f32 %v730, %v792
  %v805 = vmul.f32 %v731, %v793
  %v806 = vmul.f32 %v732, %v790
  %v807 = vmul.f32 %v733, %v791
  %v808 = vmul.f32 %v732, %v792
  %v809 = vmul.f32 %v733, %v793
  %v810 = vmul.f32 %v734, %v790
  %v811 = vmul.f32 %v735, %v791
  %v812 = vmul.f32 %v734, %v792
  %v813 = vmul.f32 %v735, %v793
  %v814 = vmul.f32 %v736, %v790
  %v815 = vmul.f32 %v737, %v791
  %v816 = vmul.f32 %v736, %v792
  %v817 = vmul.f32 %v737, %v793
  %v818 = vmul.f32 %v738, %v790
  %v819 = vmul.f32 %v739, %v791
  %v820 = vmul.f32 %v738, %v792
  %v821 = vmul.f32 %v739, %v793
  %v822 = vmul.f32 %v740, %v790
  %v823 = vmul.f32 %v741, %v791
  %v824 = vmul.f32 %v740, %v792
  %v825 = vmul.f32 %v741, %v793
  %v826 = vld [vmem:[%s9] sm:$0xff]
  %v827 = vld [vmem:[%s9 + $0x8] sm:$0xff]
  %v828 = vld [vmem:[%s9 + $0x10] sm:$0xff]
  %v829 = vld [vmem:[%s9 + $0x18] sm:$0xff]
  %v830 = vld [vmem:[%s9 + $0x20] sm:$0xff]
  %v831 = vld [vmem:[%s9 + $0x28] sm:$0xff]
  %v832 = vld [vmem:[%s9 + $0x30] sm:$0xff]
  %v833 = vld [vmem:[%s9 + $0x38] sm:$0xff]
  %v834 = vld [vmem:[%s9 + $0x40] sm:$0xff]
  %v835 = vld [vmem:[%s9 + $0x48] sm:$0xff]
  %v836 = vld [vmem:[%s9 + $0x50] sm:$0xff]
  %v837 = vld [vmem:[%s9 + $0x58] sm:$0xff]
  %v838 = vld [vmem:[%s9 + $0x60] sm:$0xff]
  %v839 = vld [vmem:[%s9 + $0x68] sm:$0xff]
  %v840 = vld [vmem:[%s9 + $0x70] sm:$0xff]
  %v841 = vld [vmem:[%s9 + $0x78] sm:$0xff]
  %v842 = vld [vmem:[%s9 + $0x80] sm:$0xff]
  %v843 = vld [vmem:[%s9 + $0x88] sm:$0xff]
  %v844 = vld [vmem:[%s9 + $0x90] sm:$0xff]
  %v845 = vld [vmem:[%s9 + $0x98] sm:$0xff]
  %v846 = vld [vmem:[%s9 + $0xa0] sm:$0xff]
  %v847 = vld [vmem:[%s9 + $0xa8] sm:$0xff]
  %v848 = vld [vmem:[%s9 + $0xb0] sm:$0xff]
  %v849 = vld [vmem:[%s9 + $0xb8] sm:$0xff]
  %v850 = vld [vmem:[%s9 + $0xc0] sm:$0xff]
  %v851 = vld [vmem:[%s9 + $0xc8] sm:$0xff]
  %v852 = vld [vmem:[%s9 + $0xd0] sm:$0xff]
  %v853 = vld [vmem:[%s9 + $0xd8] sm:$0xff]
  %v854 = vld [vmem:[%s9 + $0xe0] sm:$0xff]
  %v855 = vld [vmem:[%s9 + $0xe8] sm:$0xff]
  %v856 = vld [vmem:[%s9 + $0xf0] sm:$0xff]
  %v857 = vld [vmem:[%s9 + $0xf8] sm:$0xff]
  %v858 = vld [vmem:[%s9 + $0x100] sm:$0xff]
  %v859 = vld [vmem:[%s9 + $0x108] sm:$0xff]
  %v860 = vld [vmem:[%s9 + $0x110] sm:$0xff]
  %v861 = vld [vmem:[%s9 + $0x118] sm:$0xff]
  %v862 = vld [vmem:[%s9 + $0x120] sm:$0xff]
  %v863 = vld [vmem:[%s9 + $0x128] sm:$0xff]
  %v864 = vld [vmem:[%s9 + $0x130] sm:$0xff]
  %v865 = vld [vmem:[%s9 + $0x138] sm:$0xff]
  %v866 = vld [vmem:[%s9 + $0x140] sm:$0xff]
  %v867 = vld [vmem:[%s9 + $0x148] sm:$0xff]
  %v868 = vld [vmem:[%s9 + $0x150] sm:$0xff]
  %v869 = vld [vmem:[%s9 + $0x158] sm:$0xff]
  %v870 = vld [vmem:[%s9 + $0x160] sm:$0xff]
  %v871 = vld [vmem:[%s9 + $0x168] sm:$0xff]
  %v872 = vld [vmem:[%s9 + $0x170] sm:$0xff]
  %v873 = vld [vmem:[%s9 + $0x178] sm:$0xff]
  %v874 = vld [vmem:[%s9 + $0x180] sm:$0xff]
  %v875 = vld [vmem:[%s9 + $0x188] sm:$0xff]
  %v876 = vld [vmem:[%s9 + $0x190] sm:$0xff]
  %v877 = vld [vmem:[%s9 + $0x198] sm:$0xff]
  %v878 = vld [vmem:[%s9 + $0x1a0] sm:$0xff]
  %v879 = vld [vmem:[%s9 + $0x1a8] sm:$0xff]
  %v880 = vld [vmem:[%s9 + $0x1b0] sm:$0xff]
  %v881 = vld [vmem:[%s9 + $0x1b8] sm:$0xff]
  %v882 = vld [vmem:[%s9 + $0x1c0] sm:$0xff]
  %v883 = vld [vmem:[%s9 + $0x1c8] sm:$0xff]
  %v884 = vld [vmem:[%s9 + $0x1d0] sm:$0xff]
  %v885 = vld [vmem:[%s9 + $0x1d8] sm:$0xff]
  %v886 = vld [vmem:[%s9 + $0x1e0] sm:$0xff]
  %v887 = vld [vmem:[%s9 + $0x1e8] sm:$0xff]
  %v888 = vld [vmem:[%s9 + $0x1f0] sm:$0xff]
  %v889 = vld [vmem:[%s9 + $0x1f8] sm:$0xff]
  %890 = vmatpush.msra.mxu0 %v856
  %891 = vmatpush.msra.mxu0 %v854
  %892 = vmatpush.msra.mxu0 %v852
  %893 = vmatpush.msra.mxu0 %v850
  %894 = vmatpush.msra.mxu0 %v848
  %895 = vmatpush.msra.mxu0 %v846
  %896 = vmatpush.msra.mxu0 %v844
  %897 = vmatpush.msra.mxu0 %v842
  %898 = vmatpush.msra.mxu0 %v840
  %899 = vmatpush.msra.mxu0 %v838
  %900 = vmatpush.msra.mxu0 %v836
  %901 = vmatpush.msra.mxu0 %v834
  %902 = vmatpush.msra.mxu0 %v832
  %903 = vmatpush.msra.mxu0 %v830
  %904 = vmatpush.msra.mxu0 %v828
  %905 = vmatpush.msra.mxu0 %v826
  %906 = vmatmul.f32.gmra.mxu0 %v758
  %v907 = vpop.f32.mrf.mxu0
  %v908 = vadd.f32 0.0, %v907
  %909 = vmatmul.f32.gmra.mxu0 %v760
  %v910 = vpop.f32.mrf.mxu0
  %v911 = vadd.f32 0.0, %v910
  %912 = vmatmul.f32.gmra.mxu0 %v762
  %v913 = vpop.f32.mrf.mxu0
  %v914 = vadd.f32 0.0, %v913
  %915 = vmatmul.f32.gmra.mxu0 %v764
  %v916 = vpop.f32.mrf.mxu0
  %v917 = vadd.f32 0.0, %v916
  %918 = vmatmul.f32.gmra.mxu0 %v766
  %v919 = vpop.f32.mrf.mxu0
  %v920 = vadd.f32 0.0, %v919
  %921 = vmatmul.f32.gmra.mxu0 %v768
  %v922 = vpop.f32.mrf.mxu0
  %v923 = vadd.f32 0.0, %v922
  %924 = vmatmul.f32.gmra.mxu0 %v770
  %v925 = vpop.f32.mrf.mxu0
  %v926 = vadd.f32 0.0, %v925
  %927 = vmatmul.f32.gmra.mxu0 %v772
  %v928 = vpop.f32.mrf.mxu0
  %v929 = vadd.f32 0.0, %v928
  %930 = vmatmul.f32.gmra.mxu0 %v774
  %v931 = vpop.f32.mrf.mxu0
  %v932 = vadd.f32 0.0, %v931
  %933 = vmatmul.f32.gmra.mxu0 %v776
  %v934 = vpop.f32.mrf.mxu0
  %v935 = vadd.f32 0.0, %v934
  %936 = vmatmul.f32.gmra.mxu0 %v778
  %v937 = vpop.f32.mrf.mxu0
  %v938 = vadd.f32 0.0, %v937
  %939 = vmatmul.f32.gmra.mxu0 %v780
  %v940 = vpop.f32.mrf.mxu0
  %v941 = vadd.f32 0.0, %v940
  %942 = vmatmul.f32.gmra.mxu0 %v782
  %v943 = vpop.f32.mrf.mxu0
  %v944 = vadd.f32 0.0, %v943
  %945 = vmatmul.f32.gmra.mxu0 %v784
  %v946 = vpop.f32.mrf.mxu0
  %v947 = vadd.f32 0.0, %v946
  %948 = vmatmul.f32.gmra.mxu0 %v786
  %v949 = vpop.f32.mrf.mxu0
  %v950 = vadd.f32 0.0, %v949
  %951 = vmatmul.f32.gmra.mxu0 %v788
  %v952 = vpop.f32.mrf.mxu0
  %v953 = vadd.f32 0.0, %v952
  %954 = vdwg.mxu0
  %955 = vmatpush.msra.mxu0 %v888
  %956 = vmatpush.msra.mxu0 %v886
  %957 = vmatpush.msra.mxu0 %v884
  %958 = vmatpush.msra.mxu0 %v882
  %959 = vmatpush.msra.mxu0 %v880
  %960 = vmatpush.msra.mxu0 %v878
  %961 = vmatpush.msra.mxu0 %v876
  %962 = vmatpush.msra.mxu0 %v874
  %963 = vmatpush.msra.mxu0 %v872
  %964 = vmatpush.msra.mxu0 %v870
  %965 = vmatpush.msra.mxu0 %v868
  %966 = vmatpush.msra.mxu0 %v866
  %967 = vmatpush.msra.mxu0 %v864
  %968 = vmatpush.msra.mxu0 %v862
  %969 = vmatpush.msra.mxu0 %v860
  %970 = vmatpush.msra.mxu0 %v858
  %971 = vmatmul.f32.gmra.mxu0 %v759
  %v972 = vpop.f32.mrf.mxu0
  %v973 = vadd.f32 %v908, %v972
  %974 = vmatmul.f32.gmra.mxu0 %v761
  %v975 = vpop.f32.mrf.mxu0
  %v976 = vadd.f32 %v911, %v975
  %977 = vmatmul.f32.gmra.mxu0 %v763
  %v978 = vpop.f32.mrf.mxu0
  %v979 = vadd.f32 %v914, %v978
  %980 = vmatmul.f32.gmra.mxu0 %v765
  %v981 = vpop.f32.mrf.mxu0
  %v982 = vadd.f32 %v917, %v981
  %983 = vmatmul.f32.gmra.mxu0 %v767
  %v984 = vpop.f32.mrf.mxu0
  %v985 = vadd.f32 %v920, %v984
  %986 = vmatmul.f32.gmra.mxu0 %v769
  %v987 = vpop.f32.mrf.mxu0
  %v988 = vadd.f32 %v923, %v987
  %989 = vmatmul.f32.gmra.mxu0 %v771
  %v990 = vpop.f32.mrf.mxu0
  %v991 = vadd.f32 %v926, %v990
  %992 = vmatmul.f32.gmra.mxu0 %v773
  %v993 = vpop.f32.mrf.mxu0
  %v994 = vadd.f32 %v929, %v993
  %995 = vmatmul.f32.gmra.mxu0 %v775
  %v996 = vpop.f32.mrf.mxu0
  %v997 = vadd.f32 %v932, %v996
  %998 = vmatmul.f32.gmra.mxu0 %v777
  %v999 = vpop.f32.mrf.mxu0
  %v1000 = vadd.f32 %v935, %v999
  %1001 = vmatmul.f32.gmra.mxu0 %v779
  %v1002 = vpop.f32.mrf.mxu0
  %v1003 = vadd.f32 %v938, %v1002
  %1004 = vmatmul.f32.gmra.mxu0 %v781
  %v1005 = vpop.f32.mrf.mxu0
  %v1006 = vadd.f32 %v941, %v1005
  %1007 = vmatmul.f32.gmra.mxu0 %v783
  %v1008 = vpop.f32.mrf.mxu0
  %v1009 = vadd.f32 %v944, %v1008
  %1010 = vmatmul.f32.gmra.mxu0 %v785
  %v1011 = vpop.f32.mrf.mxu0
  %v1012 = vadd.f32 %v947, %v1011
  %1013 = vmatmul.f32.gmra.mxu0 %v787
  %v1014 = vpop.f32.mrf.mxu0
  %v1015 = vadd.f32 %v950, %v1014
  %1016 = vmatmul.f32.gmra.mxu0 %v789
  %v1017 = vpop.f32.mrf.mxu0
  %v1018 = vadd.f32 %v953, %v1017
  %1019 = vdwg.mxu0
  %1020 = vmatpush.msra.mxu0 %v857
  %1021 = vmatpush.msra.mxu0 %v855
  %1022 = vmatpush.msra.mxu0 %v853
  %1023 = vmatpush.msra.mxu0 %v851
  %1024 = vmatpush.msra.mxu0 %v849
  %1025 = vmatpush.msra.mxu0 %v847
  %1026 = vmatpush.msra.mxu0 %v845
  %1027 = vmatpush.msra.mxu0 %v843
  %1028 = vmatpush.msra.mxu0 %v841
  %1029 = vmatpush.msra.mxu0 %v839
  %1030 = vmatpush.msra.mxu0 %v837
  %1031 = vmatpush.msra.mxu0 %v835
  %1032 = vmatpush.msra.mxu0 %v833
  %1033 = vmatpush.msra.mxu0 %v831
  %1034 = vmatpush.msra.mxu0 %v829
  %1035 = vmatpush.msra.mxu0 %v827
  %1036 = vmatmul.f32.gmra.mxu0 %v758
  %v1037 = vpop.f32.mrf.mxu0
  %v1038 = vadd.f32 0.0, %v1037
  %1039 = vmatmul.f32.gmra.mxu0 %v760
  %v1040 = vpop.f32.mrf.mxu0
  %v1041 = vadd.f32 0.0, %v1040
  %1042 = vmatmul.f32.gmra.mxu0 %v762
  %v1043 = vpop.f32.mrf.mxu0
  %v1044 = vadd.f32 0.0, %v1043
  %1045 = vmatmul.f32.gmra.mxu0 %v764
  %v1046 = vpop.f32.mrf.mxu0
  %v1047 = vadd.f32 0.0, %v1046
  %1048 = vmatmul.f32.gmra.mxu0 %v766
  %v1049 = vpop.f32.mrf.mxu0
  %v1050 = vadd.f32 0.0, %v1049
  %1051 = vmatmul.f32.gmra.mxu0 %v768
  %v1052 = vpop.f32.mrf.mxu0
  %v1053 = vadd.f32 0.0, %v1052
  %1054 = vmatmul.f32.gmra.mxu0 %v770
  %v1055 = vpop.f32.mrf.mxu0
  %v1056 = vadd.f32 0.0, %v1055
  %1057 = vmatmul.f32.gmra.mxu0 %v772
  %v1058 = vpop.f32.mrf.mxu0
  %v1059 = vadd.f32 0.0, %v1058
  %1060 = vmatmul.f32.gmra.mxu0 %v774
  %v1061 = vpop.f32.mrf.mxu0
  %v1062 = vadd.f32 0.0, %v1061
  %1063 = vmatmul.f32.gmra.mxu0 %v776
  %v1064 = vpop.f32.mrf.mxu0
  %v1065 = vadd.f32 0.0, %v1064
  %1066 = vmatmul.f32.gmra.mxu0 %v778
  %v1067 = vpop.f32.mrf.mxu0
  %v1068 = vadd.f32 0.0, %v1067
  %1069 = vmatmul.f32.gmra.mxu0 %v780
  %v1070 = vpop.f32.mrf.mxu0
  %v1071 = vadd.f32 0.0, %v1070
  %1072 = vmatmul.f32.gmra.mxu0 %v782
  %v1073 = vpop.f32.mrf.mxu0
  %v1074 = vadd.f32 0.0, %v1073
  %1075 = vmatmul.f32.gmra.mxu0 %v784
  %v1076 = vpop.f32.mrf.mxu0
  %v1077 = vadd.f32 0.0, %v1076
  %1078 = vmatmul.f32.gmra.mxu0 %v786
  %v1079 = vpop.f32.mrf.mxu0
  %v1080 = vadd.f32 0.0, %v1079
  %1081 = vmatmul.f32.gmra.mxu0 %v788
  %v1082 = vpop.f32.mrf.mxu0
  %v1083 = vadd.f32 0.0, %v1082
  %1084 = vdwg.mxu0
  %1085 = vmatpush.msra.mxu0 %v889
  %1086 = vmatpush.msra.mxu0 %v887
  %1087 = vmatpush.msra.mxu0 %v885
  %1088 = vmatpush.msra.mxu0 %v883
  %1089 = vmatpush.msra.mxu0 %v881
  %1090 = vmatpush.msra.mxu0 %v879
  %1091 = vmatpush.msra.mxu0 %v877
  %1092 = vmatpush.msra.mxu0 %v875
  %1093 = vmatpush.msra.mxu0 %v873
  %1094 = vmatpush.msra.mxu0 %v871
  %1095 = vmatpush.msra.mxu0 %v869
  %1096 = vmatpush.msra.mxu0 %v867
  %1097 = vmatpush.msra.mxu0 %v865
  %1098 = vmatpush.msra.mxu0 %v863
  %1099 = vmatpush.msra.mxu0 %v861
  %1100 = vmatpush.msra.mxu0 %v859
  %1101 = vmatmul.f32.gmra.mxu0 %v759
  %v1102 = vpop.f32.mrf.mxu0
  %v1103 = vadd.f32 %v1038, %v1102
  %1104 = vmatmul.f32.gmra.mxu0 %v761
  %v1105 = vpop.f32.mrf.mxu0
  %v1106 = vadd.f32 %v1041, %v1105
  %1107 = vmatmul.f32.gmra.mxu0 %v763
  %v1108 = vpop.f32.mrf.mxu0
  %v1109 = vadd.f32 %v1044, %v1108
  %1110 = vmatmul.f32.gmra.mxu0 %v765
  %v1111 = vpop.f32.mrf.mxu0
  %v1112 = vadd.f32 %v1047, %v1111
  %1113 = vmatmul.f32.gmra.mxu0 %v767
  %v1114 = vpop.f32.mrf.mxu0
  %v1115 = vadd.f32 %v1050, %v1114
  %1116 = vmatmul.f32.gmra.mxu0 %v769
  %v1117 = vpop.f32.mrf.mxu0
  %v1118 = vadd.f32 %v1053, %v1117
  %1119 = vmatmul.f32.gmra.mxu0 %v771
  %v1120 = vpop.f32.mrf.mxu0
  %v1121 = vadd.f32 %v1056, %v1120
  %1122 = vmatmul.f32.gmra.mxu0 %v773
  %v1123 = vpop.f32.mrf.mxu0
  %v1124 = vadd.f32 %v1059, %v1123
  %1125 = vmatmul.f32.gmra.mxu0 %v775
  %v1126 = vpop.f32.mrf.mxu0
  %v1127 = vadd.f32 %v1062, %v1126
  %1128 = vmatmul.f32.gmra.mxu0 %v777
  %v1129 = vpop.f32.mrf.mxu0
  %v1130 = vadd.f32 %v1065, %v1129
  %1131 = vmatmul.f32.gmra.mxu0 %v779
  %v1132 = vpop.f32.mrf.mxu0
  %v1133 = vadd.f32 %v1068, %v1132
  %1134 = vmatmul.f32.gmra.mxu0 %v781
  %v1135 = vpop.f32.mrf.mxu0
  %v1136 = vadd.f32 %v1071, %v1135
  %1137 = vmatmul.f32.gmra.mxu0 %v783
  %v1138 = vpop.f32.mrf.mxu0
  %v1139 = vadd.f32 %v1074, %v1138
  %1140 = vmatmul.f32.gmra.mxu0 %v785
  %v1141 = vpop.f32.mrf.mxu0
  %v1142 = vadd.f32 %v1077, %v1141
  %1143 = vmatmul.f32.gmra.mxu0 %v787
  %v1144 = vpop.f32.mrf.mxu0
  %v1145 = vadd.f32 %v1080, %v1144
  %1146 = vmatmul.f32.gmra.mxu0 %v789
  %v1147 = vpop.f32.mrf.mxu0
  %v1148 = vadd.f32 %v1083, %v1147
  %1149 = vdwg.mxu0
  %1150 = vmatpush.msra.mxu0 %v856
  %1151 = vmatpush.msra.mxu0 %v854
  %1152 = vmatpush.msra.mxu0 %v852
  %1153 = vmatpush.msra.mxu0 %v850
  %1154 = vmatpush.msra.mxu0 %v848
  %1155 = vmatpush.msra.mxu0 %v846
  %1156 = vmatpush.msra.mxu0 %v844
  %1157 = vmatpush.msra.mxu0 %v842
  %1158 = vmatpush.msra.mxu0 %v840
  %1159 = vmatpush.msra.mxu0 %v838
  %1160 = vmatpush.msra.mxu0 %v836
  %1161 = vmatpush.msra.mxu0 %v834
  %1162 = vmatpush.msra.mxu0 %v832
  %1163 = vmatpush.msra.mxu0 %v830
  %1164 = vmatpush.msra.mxu0 %v828
  %1165 = vmatpush.msra.mxu0 %v826
  %1166 = vmatmul.f32.gmra.mxu0 %v794
  %v1167 = vpop.f32.mrf.mxu0
  %v1168 = vadd.f32 0.0, %v1167
  %1169 = vmatmul.f32.gmra.mxu0 %v796
  %v1170 = vpop.f32.mrf.mxu0
  %v1171 = vadd.f32 0.0, %v1170
  %1172 = vmatmul.f32.gmra.mxu0 %v798
  %v1173 = vpop.f32.mrf.mxu0
  %v1174 = vadd.f32 0.0, %v1173
  %1175 = vmatmul.f32.gmra.mxu0 %v800
  %v1176 = vpop.f32.mrf.mxu0
  %v1177 = vadd.f32 0.0, %v1176
  %1178 = vmatmul.f32.gmra.mxu0 %v802
  %v1179 = vpop.f32.mrf.mxu0
  %v1180 = vadd.f32 0.0, %v1179
  %1181 = vmatmul.f32.gmra.mxu0 %v804
  %v1182 = vpop.f32.mrf.mxu0
  %v1183 = vadd.f32 0.0, %v1182
  %1184 = vmatmul.f32.gmra.mxu0 %v806
  %v1185 = vpop.f32.mrf.mxu0
  %v1186 = vadd.f32 0.0, %v1185
  %1187 = vmatmul.f32.gmra.mxu0 %v808
  %v1188 = vpop.f32.mrf.mxu0
  %v1189 = vadd.f32 0.0, %v1188
  %1190 = vmatmul.f32.gmra.mxu0 %v810
  %v1191 = vpop.f32.mrf.mxu0
  %v1192 = vadd.f32 0.0, %v1191
  %1193 = vmatmul.f32.gmra.mxu0 %v812
  %v1194 = vpop.f32.mrf.mxu0
  %v1195 = vadd.f32 0.0, %v1194
  %1196 = vmatmul.f32.gmra.mxu0 %v814
  %v1197 = vpop.f32.mrf.mxu0
  %v1198 = vadd.f32 0.0, %v1197
  %1199 = vmatmul.f32.gmra.mxu0 %v816
  %v1200 = vpop.f32.mrf.mxu0
  %v1201 = vadd.f32 0.0, %v1200
  %1202 = vmatmul.f32.gmra.mxu0 %v818
  %v1203 = vpop.f32.mrf.mxu0
  %v1204 = vadd.f32 0.0, %v1203
  %1205 = vmatmul.f32.gmra.mxu0 %v820
  %v1206 = vpop.f32.mrf.mxu0
  %v1207 = vadd.f32 0.0, %v1206
  %1208 = vmatmul.f32.gmra.mxu0 %v822
  %v1209 = vpop.f32.mrf.mxu0
  %v1210 = vadd.f32 0.0, %v1209
  %1211 = vmatmul.f32.gmra.mxu0 %v824
  %v1212 = vpop.f32.mrf.mxu0
  %v1213 = vadd.f32 0.0, %v1212
  %1214 = vdwg.mxu0
  %1215 = vmatpush.msra.mxu0 %v888
  %1216 = vmatpush.msra.mxu0 %v886
  %1217 = vmatpush.msra.mxu0 %v884
  %1218 = vmatpush.msra.mxu0 %v882
  %1219 = vmatpush.msra.mxu0 %v880
  %1220 = vmatpush.msra.mxu0 %v878
  %1221 = vmatpush.msra.mxu0 %v876
  %1222 = vmatpush.msra.mxu0 %v874
  %1223 = vmatpush.msra.mxu0 %v872
  %1224 = vmatpush.msra.mxu0 %v870
  %1225 = vmatpush.msra.mxu0 %v868
  %1226 = vmatpush.msra.mxu0 %v866
  %1227 = vmatpush.msra.mxu0 %v864
  %1228 = vmatpush.msra.mxu0 %v862
  %1229 = vmatpush.msra.mxu0 %v860
  %1230 = vmatpush.msra.mxu0 %v858
  %1231 = vmatmul.f32.gmra.mxu0 %v795
  %v1232 = vpop.f32.mrf.mxu0
  %v1233 = vadd.f32 %v1168, %v1232
  %1234 = vmatmul.f32.gmra.mxu0 %v797
  %v1235 = vpop.f32.mrf.mxu0
  %v1236 = vadd.f32 %v1171, %v1235
  %1237 = vmatmul.f32.gmra.mxu0 %v799
  %v1238 = vpop.f32.mrf.mxu0
  %v1239 = vadd.f32 %v1174, %v1238
  %1240 = vmatmul.f32.gmra.mxu0 %v801
  %v1241 = vpop.f32.mrf.mxu0
  %v1242 = vadd.f32 %v1177, %v1241
  %1243 = vmatmul.f32.gmra.mxu0 %v803
  %v1244 = vpop.f32.mrf.mxu0
  %v1245 = vadd.f32 %v1180, %v1244
  %1246 = vmatmul.f32.gmra.mxu0 %v805
  %v1247 = vpop.f32.mrf.mxu0
  %v1248 = vadd.f32 %v1183, %v1247
  %1249 = vmatmul.f32.gmra.mxu0 %v807
  %v1250 = vpop.f32.mrf.mxu0
  %v1251 = vadd.f32 %v1186, %v1250
  %1252 = vmatmul.f32.gmra.mxu0 %v809
  %v1253 = vpop.f32.mrf.mxu0
  %v1254 = vadd.f32 %v1189, %v1253
  %1255 = vmatmul.f32.gmra.mxu0 %v811
  %v1256 = vpop.f32.mrf.mxu0
  %v1257 = vadd.f32 %v1192, %v1256
  %1258 = vmatmul.f32.gmra.mxu0 %v813
  %v1259 = vpop.f32.mrf.mxu0
  %v1260 = vadd.f32 %v1195, %v1259
  %1261 = vmatmul.f32.gmra.mxu0 %v815
  %v1262 = vpop.f32.mrf.mxu0
  %v1263 = vadd.f32 %v1198, %v1262
  %1264 = vmatmul.f32.gmra.mxu0 %v817
  %v1265 = vpop.f32.mrf.mxu0
  %v1266 = vadd.f32 %v1201, %v1265
  %1267 = vmatmul.f32.gmra.mxu0 %v819
  %v1268 = vpop.f32.mrf.mxu0
  %v1269 = vadd.f32 %v1204, %v1268
  %1270 = vmatmul.f32.gmra.mxu0 %v821
  %v1271 = vpop.f32.mrf.mxu0
  %v1272 = vadd.f32 %v1207, %v1271
  %1273 = vmatmul.f32.gmra.mxu0 %v823
  %v1274 = vpop.f32.mrf.mxu0
  %v1275 = vadd.f32 %v1210, %v1274
  %1276 = vmatmul.f32.gmra.mxu0 %v825
  %v1277 = vpop.f32.mrf.mxu0
  %v1278 = vadd.f32 %v1213, %v1277
  %1279 = vdwg.mxu0
  %1280 = vmatpush.msra.mxu0 %v857
  %1281 = vmatpush.msra.mxu0 %v855
  %1282 = vmatpush.msra.mxu0 %v853
  %1283 = vmatpush.msra.mxu0 %v851
  %1284 = vmatpush.msra.mxu0 %v849
  %1285 = vmatpush.msra.mxu0 %v847
  %1286 = vmatpush.msra.mxu0 %v845
  %1287 = vmatpush.msra.mxu0 %v843
  %1288 = vmatpush.msra.mxu0 %v841
  %1289 = vmatpush.msra.mxu0 %v839
  %1290 = vmatpush.msra.mxu0 %v837
  %1291 = vmatpush.msra.mxu0 %v835
  %1292 = vmatpush.msra.mxu0 %v833
  %1293 = vmatpush.msra.mxu0 %v831
  %1294 = vmatpush.msra.mxu0 %v829
  %1295 = vmatpush.msra.mxu0 %v827
  %1296 = vmatmul.f32.gmra.mxu0 %v794
  %v1297 = vpop.f32.mrf.mxu0
  %v1298 = vadd.f32 0.0, %v1297
  %1299 = vmatmul.f32.gmra.mxu0 %v796
  %v1300 = vpop.f32.mrf.mxu0
  %v1301 = vadd.f32 0.0, %v1300
  %1302 = vmatmul.f32.gmra.mxu0 %v798
  %v1303 = vpop.f32.mrf.mxu0
  %v1304 = vadd.f32 0.0, %v1303
  %1305 = vmatmul.f32.gmra.mxu0 %v800
  %v1306 = vpop.f32.mrf.mxu0
  %v1307 = vadd.f32 0.0, %v1306
  %1308 = vmatmul.f32.gmra.mxu0 %v802
  %v1309 = vpop.f32.mrf.mxu0
  %v1310 = vadd.f32 0.0, %v1309
  %1311 = vmatmul.f32.gmra.mxu0 %v804
  %v1312 = vpop.f32.mrf.mxu0
  %v1313 = vadd.f32 0.0, %v1312
  %1314 = vmatmul.f32.gmra.mxu0 %v806
  %v1315 = vpop.f32.mrf.mxu0
  %v1316 = vadd.f32 0.0, %v1315
  %1317 = vmatmul.f32.gmra.mxu0 %v808
  %v1318 = vpop.f32.mrf.mxu0
  %v1319 = vadd.f32 0.0, %v1318
  %1320 = vmatmul.f32.gmra.mxu0 %v810
  %v1321 = vpop.f32.mrf.mxu0
  %v1322 = vadd.f32 0.0, %v1321
  %1323 = vmatmul.f32.gmra.mxu0 %v812
  %v1324 = vpop.f32.mrf.mxu0
  %v1325 = vadd.f32 0.0, %v1324
  %1326 = vmatmul.f32.gmra.mxu0 %v814
  %v1327 = vpop.f32.mrf.mxu0
  %v1328 = vadd.f32 0.0, %v1327
  %1329 = vmatmul.f32.gmra.mxu0 %v816
  %v1330 = vpop.f32.mrf.mxu0
  %v1331 = vadd.f32 0.0, %v1330
  %1332 = vmatmul.f32.gmra.mxu0 %v818
  %v1333 = vpop.f32.mrf.mxu0
  %v1334 = vadd.f32 0.0, %v1333
  %1335 = vmatmul.f32.gmra.mxu0 %v820
  %v1336 = vpop.f32.mrf.mxu0
  %v1337 = vadd.f32 0.0, %v1336
  %1338 = vmatmul.f32.gmra.mxu0 %v822
  %v1339 = vpop.f32.mrf.mxu0
  %v1340 = vadd.f32 0.0, %v1339
  %1341 = vmatmul.f32.gmra.mxu0 %v824
  %v1342 = vpop.f32.mrf.mxu0
  %v1343 = vadd.f32 0.0, %v1342
  %1344 = vdwg.mxu0
  %1345 = vmatpush.msra.mxu0 %v889
  %1346 = vmatpush.msra.mxu0 %v887
  %1347 = vmatpush.msra.mxu0 %v885
  %1348 = vmatpush.msra.mxu0 %v883
  %1349 = vmatpush.msra.mxu0 %v881
  %1350 = vmatpush.msra.mxu0 %v879
  %1351 = vmatpush.msra.mxu0 %v877
  %1352 = vmatpush.msra.mxu0 %v875
  %1353 = vmatpush.msra.mxu0 %v873
  %1354 = vmatpush.msra.mxu0 %v871
  %1355 = vmatpush.msra.mxu0 %v869
  %1356 = vmatpush.msra.mxu0 %v867
  %1357 = vmatpush.msra.mxu0 %v865
  %1358 = vmatpush.msra.mxu0 %v863
  %1359 = vmatpush.msra.mxu0 %v861
  %1360 = vmatpush.msra.mxu0 %v859
  %1361 = vmatmul.f32.gmra.mxu0 %v795
  %v1362 = vpop.f32.mrf.mxu0
  %v1363 = vadd.f32 %v1298, %v1362
  %1364 = vmatmul.f32.gmra.mxu0 %v797
  %v1365 = vpop.f32.mrf.mxu0
  %v1366 = vadd.f32 %v1301, %v1365
  %1367 = vmatmul.f32.gmra.mxu0 %v799
  %v1368 = vpop.f32.mrf.mxu0
  %v1369 = vadd.f32 %v1304, %v1368
  %1370 = vmatmul.f32.gmra.mxu0 %v801
  %v1371 = vpop.f32.mrf.mxu0
  %v1372 = vadd.f32 %v1307, %v1371
  %1373 = vmatmul.f32.gmra.mxu0 %v803
  %v1374 = vpop.f32.mrf.mxu0
  %v1375 = vadd.f32 %v1310, %v1374
  %1376 = vmatmul.f32.gmra.mxu0 %v805
  %v1377 = vpop.f32.mrf.mxu0
  %v1378 = vadd.f32 %v1313, %v1377
  %1379 = vmatmul.f32.gmra.mxu0 %v807
  %v1380 = vpop.f32.mrf.mxu0
  %v1381 = vadd.f32 %v1316, %v1380
  %1382 = vmatmul.f32.gmra.mxu0 %v809
  %v1383 = vpop.f32.mrf.mxu0
  %v1384 = vadd.f32 %v1319, %v1383
  %1385 = vmatmul.f32.gmra.mxu0 %v811
  %v1386 = vpop.f32.mrf.mxu0
  %v1387 = vadd.f32 %v1322, %v1386
  %1388 = vmatmul.f32.gmra.mxu0 %v813
  %v1389 = vpop.f32.mrf.mxu0
  %v1390 = vadd.f32 %v1325, %v1389
  %1391 = vmatmul.f32.gmra.mxu0 %v815
  %v1392 = vpop.f32.mrf.mxu0
  %v1393 = vadd.f32 %v1328, %v1392
  %1394 = vmatmul.f32.gmra.mxu0 %v817
  %v1395 = vpop.f32.mrf.mxu0
  %v1396 = vadd.f32 %v1331, %v1395
  %1397 = vmatmul.f32.gmra.mxu0 %v819
  %v1398 = vpop.f32.mrf.mxu0
  %v1399 = vadd.f32 %v1334, %v1398
  %1400 = vmatmul.f32.gmra.mxu0 %v821
  %v1401 = vpop.f32.mrf.mxu0
  %v1402 = vadd.f32 %v1337, %v1401
  %1403 = vmatmul.f32.gmra.mxu0 %v823
  %v1404 = vpop.f32.mrf.mxu0
  %v1405 = vadd.f32 %v1340, %v1404
  %1406 = vmatmul.f32.gmra.mxu0 %v825
  %v1407 = vpop.f32.mrf.mxu0
  %v1408 = vadd.f32 %v1343, %v1407
  %1409 = vdwg.mxu0
  %v1412 = vrot.slane %v696, 7
  %v1413 = vsel %vm700, %v695, %v1412
  %v1414 = vsel %vm702, %v695, %v1412
  %v1415 = vrot.slane %v1414, 1
  %v1416 = vsel %vm705, %v695, %v1412
  %v1417 = vrot.slane %v1416, 2
  %v1418 = vsel %vm708, %v695, %v1412
  %v1419 = vrot.slane %v1418, 3
  %v1420 = vsel %vm711, %v695, %v1412
  %v1421 = vrot.slane %v1420, 4
  %v1422 = vsel %vm714, %v695, %v1412
  %v1423 = vrot.slane %v1422, 5
  %v1424 = vsel %vm717, %v695, %v1412
  %v1425 = vrot.slane %v1424, 6
  %v1426 = vsel %vm330, %v1412, %v695
  %v1427 = vrot.slane %v1426, 7
  %v1428 = vld [vmem:[%s10] sm:$0xff]
  %v1429 = vld [vmem:[%s10 + $0x8] sm:$0xff]
  %v1430 = vld [vmem:[%s10 + $0x10] sm:$0xff]
  %v1431 = vld [vmem:[%s10 + $0x18] sm:$0xff]
  %v1432 = vperm.slane %v1413, 0
  %v1433 = vperm.slane %v1413, 1
  %v1434 = vperm.slane %v1415, 0
  %v1435 = vperm.slane %v1415, 1
  %v1436 = vperm.slane %v1417, 0
  %v1437 = vperm.slane %v1417, 1
  %v1438 = vperm.slane %v1419, 0
  %v1439 = vperm.slane %v1419, 1
  %v1440 = vperm.slane %v1421, 0
  %v1441 = vperm.slane %v1421, 1
  %v1442 = vperm.slane %v1423, 0
  %v1443 = vperm.slane %v1423, 1
  %v1444 = vperm.slane %v1425, 0
  %v1445 = vperm.slane %v1425, 1
  %v1446 = vperm.slane %v1427, 0
  %v1447 = vperm.slane %v1427, 1
  %v1464 = vmul.f32 %v1432, %v1428
  %v1465 = vmul.f32 %v1433, %v1429
  %v1466 = vmul.f32 %v1432, %v1430
  %v1467 = vmul.f32 %v1433, %v1431
  %v1468 = vmul.f32 %v1434, %v1428
  %v1469 = vmul.f32 %v1435, %v1429
  %v1470 = vmul.f32 %v1434, %v1430
  %v1471 = vmul.f32 %v1435, %v1431
  %v1472 = vmul.f32 %v1436, %v1428
  %v1473 = vmul.f32 %v1437, %v1429
  %v1474 = vmul.f32 %v1436, %v1430
  %v1475 = vmul.f32 %v1437, %v1431
  %v1476 = vmul.f32 %v1438, %v1428
  %v1477 = vmul.f32 %v1439, %v1429
  %v1478 = vmul.f32 %v1438, %v1430
  %v1479 = vmul.f32 %v1439, %v1431
  %v1480 = vmul.f32 %v1440, %v1428
  %v1481 = vmul.f32 %v1441, %v1429
  %v1482 = vmul.f32 %v1440, %v1430
  %v1483 = vmul.f32 %v1441, %v1431
  %v1484 = vmul.f32 %v1442, %v1428
  %v1485 = vmul.f32 %v1443, %v1429
  %v1486 = vmul.f32 %v1442, %v1430
  %v1487 = vmul.f32 %v1443, %v1431
  %v1488 = vmul.f32 %v1444, %v1428
  %v1489 = vmul.f32 %v1445, %v1429
  %v1490 = vmul.f32 %v1444, %v1430
  %v1491 = vmul.f32 %v1445, %v1431
  %v1492 = vmul.f32 %v1446, %v1428
  %v1493 = vmul.f32 %v1447, %v1429
  %v1494 = vmul.f32 %v1446, %v1430
  %v1495 = vmul.f32 %v1447, %v1431
  %v1496 = vmul.f32 %v1464, 1.442695
  %v1497 = vpow.pop %v1496
  %v1498 = vmul.f32 %v1465, 1.442695
  %v1499 = vpow.pop %v1498
  %v1500 = vmul.f32 %v1466, 1.442695
  %v1501 = vpow.pop %v1500
  %v1502 = vmul.f32 %v1467, 1.442695
  %v1503 = vpow.pop %v1502
  %v1504 = vmul.f32 %v1468, 1.442695
  %v1505 = vpow.pop %v1504
  %v1506 = vmul.f32 %v1469, 1.442695
  %v1507 = vpow.pop %v1506
  %v1508 = vmul.f32 %v1470, 1.442695
  %v1509 = vpow.pop %v1508
  %v1510 = vmul.f32 %v1471, 1.442695
  %v1511 = vpow.pop %v1510
  %v1512 = vmul.f32 %v1472, 1.442695
  %v1513 = vpow.pop %v1512
  %v1514 = vmul.f32 %v1473, 1.442695
  %v1515 = vpow.pop %v1514
  %v1516 = vmul.f32 %v1474, 1.442695
  %v1517 = vpow.pop %v1516
  %v1518 = vmul.f32 %v1475, 1.442695
  %v1519 = vpow.pop %v1518
  %v1520 = vmul.f32 %v1476, 1.442695
  %v1521 = vpow.pop %v1520
  %v1522 = vmul.f32 %v1477, 1.442695
  %v1523 = vpow.pop %v1522
  %v1524 = vmul.f32 %v1478, 1.442695
  %v1525 = vpow.pop %v1524
  %v1526 = vmul.f32 %v1479, 1.442695
  %v1527 = vpow.pop %v1526
  %v1528 = vmul.f32 %v1480, 1.442695
  %v1529 = vpow.pop %v1528
  %v1530 = vmul.f32 %v1481, 1.442695
  %v1531 = vpow.pop %v1530
  %v1532 = vmul.f32 %v1482, 1.442695
  %v1533 = vpow.pop %v1532
  %v1534 = vmul.f32 %v1483, 1.442695
  %v1535 = vpow.pop %v1534
  %v1536 = vmul.f32 %v1484, 1.442695
  %v1537 = vpow.pop %v1536
  %v1538 = vmul.f32 %v1485, 1.442695
  %v1539 = vpow.pop %v1538
  %v1540 = vmul.f32 %v1486, 1.442695
  %v1541 = vpow.pop %v1540
  %v1542 = vmul.f32 %v1487, 1.442695
  %v1543 = vpow.pop %v1542
  %v1544 = vmul.f32 %v1488, 1.442695
  %v1545 = vpow.pop %v1544
  %v1546 = vmul.f32 %v1489, 1.442695
  %v1547 = vpow.pop %v1546
  %v1548 = vmul.f32 %v1490, 1.442695
  %v1549 = vpow.pop %v1548
  %v1550 = vmul.f32 %v1491, 1.442695
  %v1551 = vpow.pop %v1550
  %v1552 = vmul.f32 %v1492, 1.442695
  %v1553 = vpow.pop %v1552
  %v1554 = vmul.f32 %v1493, 1.442695
  %v1555 = vpow.pop %v1554
  %v1556 = vmul.f32 %v1494, 1.442695
  %v1557 = vpow.pop %v1556
  %v1558 = vmul.f32 %v1495, 1.442695
  %v1559 = vpow.pop %v1558
  %v1560 = vmul.f32 %v695, %v413
  %v1561 = vmul.f32 %v696, %v428
  %v1564 = vrot.slane %v1561, 7
  %v1565 = vsel %vm700, %v1560, %v1564
  %v1566 = vsel %vm702, %v1560, %v1564
  %v1567 = vrot.slane %v1566, 1
  %v1568 = vsel %vm705, %v1560, %v1564
  %v1569 = vrot.slane %v1568, 2
  %v1570 = vsel %vm708, %v1560, %v1564
  %v1571 = vrot.slane %v1570, 3
  %v1572 = vsel %vm711, %v1560, %v1564
  %v1573 = vrot.slane %v1572, 4
  %v1574 = vsel %vm714, %v1560, %v1564
  %v1575 = vrot.slane %v1574, 5
  %v1576 = vsel %vm717, %v1560, %v1564
  %v1577 = vrot.slane %v1576, 6
  %v1578 = vsel %vm330, %v1564, %v1560
  %v1579 = vrot.slane %v1578, 7
  %v1580 = vperm.slane %v1565, 0
  %v1581 = vperm.slane %v1565, 1
  %v1582 = vperm.slane %v1567, 0
  %v1583 = vperm.slane %v1567, 1
  %v1584 = vperm.slane %v1569, 0
  %v1585 = vperm.slane %v1569, 1
  %v1586 = vperm.slane %v1571, 0
  %v1587 = vperm.slane %v1571, 1
  %v1588 = vperm.slane %v1573, 0
  %v1589 = vperm.slane %v1573, 1
  %v1590 = vperm.slane %v1575, 0
  %v1591 = vperm.slane %v1575, 1
  %v1592 = vperm.slane %v1577, 0
  %v1593 = vperm.slane %v1577, 1
  %v1594 = vperm.slane %v1579, 0
  %v1595 = vperm.slane %v1579, 1
  %v1612 = vmul.f32 %v1580, %v973
  %v1613 = vmul.f32 %v1581, %v1103
  %v1614 = vmul.f32 %v1580, %v976
  %v1615 = vmul.f32 %v1581, %v1106
  %v1616 = vmul.f32 %v1582, %v979
  %v1617 = vmul.f32 %v1583, %v1109
  %v1618 = vmul.f32 %v1582, %v982
  %v1619 = vmul.f32 %v1583, %v1112
  %v1620 = vmul.f32 %v1584, %v985
  %v1621 = vmul.f32 %v1585, %v1115
  %v1622 = vmul.f32 %v1584, %v988
  %v1623 = vmul.f32 %v1585, %v1118
  %v1624 = vmul.f32 %v1586, %v991
  %v1625 = vmul.f32 %v1587, %v1121
  %v1626 = vmul.f32 %v1586, %v994
  %v1627 = vmul.f32 %v1587, %v1124
  %v1628 = vmul.f32 %v1588, %v997
  %v1629 = vmul.f32 %v1589, %v1127
  %v1630 = vmul.f32 %v1588, %v1000
  %v1631 = vmul.f32 %v1589, %v1130
  %v1632 = vmul.f32 %v1590, %v1003
  %v1633 = vmul.f32 %v1591, %v1133
  %v1634 = vmul.f32 %v1590, %v1006
  %v1635 = vmul.f32 %v1591, %v1136
  %v1636 = vmul.f32 %v1592, %v1009
  %v1637 = vmul.f32 %v1593, %v1139
  %v1638 = vmul.f32 %v1592, %v1012
  %v1639 = vmul.f32 %v1593, %v1142
  %v1640 = vmul.f32 %v1594, %v1015
  %v1641 = vmul.f32 %v1595, %v1145
  %v1642 = vmul.f32 %v1594, %v1018
  %v1643 = vmul.f32 %v1595, %v1148
  %v1644 = vmul.f32 %v1497, 0.0
  %v1645 = vmul.f32 %v1499, 0.0
  %v1646 = vmul.f32 %v1501, 0.0
  %v1647 = vmul.f32 %v1503, 0.0
  %v1648 = vadd.f32 %v1644, %v1612
  %v1649 = vadd.f32 %v1645, %v1613
  %v1650 = vadd.f32 %v1646, %v1614
  %v1651 = vadd.f32 %v1647, %v1615
  %v1652 = vmul.f32 %v1648, %v1233
  %v1653 = vmul.f32 %v1649, %v1363
  %v1654 = vmul.f32 %v1650, %v1236
  %v1655 = vmul.f32 %v1651, %v1366
  %v1656 = vadd.f32 %v1652, %v1654
  %v1657 = vrot.slane %v1656, 4
  %v1658 = vadd.f32 %v1656, %v1657
  %v1659 = vrot.slane %v1658, 2
  %v1660 = vadd.f32 %v1658, %v1659
  %v1661 = vrot.slane %v1660, 1
  %v1662 = vadd.f32 %v1660, %v1661
  %v1663 = vadd.f32 %v1653, %v1655
  %v1664 = vrot.slane %v1663, 4
  %v1665 = vadd.f32 %v1663, %v1664
  %v1666 = vrot.slane %v1665, 2
  %v1667 = vadd.f32 %v1665, %v1666
  %v1668 = vrot.slane %v1667, 1
  %v1669 = vadd.f32 %v1667, %v1668
  %v1670 = vmul.f32 %v1505, %v1648
  %v1671 = vmul.f32 %v1507, %v1649
  %v1672 = vmul.f32 %v1509, %v1650
  %v1673 = vmul.f32 %v1511, %v1651
  %v1674 = vadd.f32 %v1670, %v1616
  %v1675 = vadd.f32 %v1671, %v1617
  %v1676 = vadd.f32 %v1672, %v1618
  %v1677 = vadd.f32 %v1673, %v1619
  %v1678 = vmul.f32 %v1674, %v1239
  %v1679 = vmul.f32 %v1675, %v1369
  %v1680 = vmul.f32 %v1676, %v1242
  %v1681 = vmul.f32 %v1677, %v1372
  %v1682 = vadd.f32 %v1678, %v1680
  %v1683 = vrot.slane %v1682, 4
  %v1684 = vadd.f32 %v1682, %v1683
  %v1685 = vrot.slane %v1684, 2
  %v1686 = vadd.f32 %v1684, %v1685
  %v1687 = vrot.slane %v1686, 1
  %v1688 = vadd.f32 %v1686, %v1687
  %v1689 = vadd.f32 %v1679, %v1681
  %v1690 = vrot.slane %v1689, 4
  %v1691 = vadd.f32 %v1689, %v1690
  %v1692 = vrot.slane %v1691, 2
  %v1693 = vadd.f32 %v1691, %v1692
  %v1694 = vrot.slane %v1693, 1
  %v1695 = vadd.f32 %v1693, %v1694
  %v1696 = vmul.f32 %v1513, %v1674
  %v1697 = vmul.f32 %v1515, %v1675
  %v1698 = vmul.f32 %v1517, %v1676
  %v1699 = vmul.f32 %v1519, %v1677
  %v1700 = vadd.f32 %v1696, %v1620
  %v1701 = vadd.f32 %v1697, %v1621
  %v1702 = vadd.f32 %v1698, %v1622
  %v1703 = vadd.f32 %v1699, %v1623
  %v1704 = vmul.f32 %v1700, %v1245
  %v1705 = vmul.f32 %v1701, %v1375
  %v1706 = vmul.f32 %v1702, %v1248
  %v1707 = vmul.f32 %v1703, %v1378
  %v1708 = vadd.f32 %v1704, %v1706
  %v1709 = vrot.slane %v1708, 4
  %v1710 = vadd.f32 %v1708, %v1709
  %v1711 = vrot.slane %v1710, 2
  %v1712 = vadd.f32 %v1710, %v1711
  %v1713 = vrot.slane %v1712, 1
  %v1714 = vadd.f32 %v1712, %v1713
  %v1715 = vadd.f32 %v1705, %v1707
  %v1716 = vrot.slane %v1715, 4
  %v1717 = vadd.f32 %v1715, %v1716
  %v1718 = vrot.slane %v1717, 2
  %v1719 = vadd.f32 %v1717, %v1718
  %v1720 = vrot.slane %v1719, 1
  %v1721 = vadd.f32 %v1719, %v1720
  %v1722 = vmul.f32 %v1521, %v1700
  %v1723 = vmul.f32 %v1523, %v1701
  %v1724 = vmul.f32 %v1525, %v1702
  %v1725 = vmul.f32 %v1527, %v1703
  %v1726 = vadd.f32 %v1722, %v1624
  %v1727 = vadd.f32 %v1723, %v1625
  %v1728 = vadd.f32 %v1724, %v1626
  %v1729 = vadd.f32 %v1725, %v1627
  %v1730 = vmul.f32 %v1726, %v1251
  %v1731 = vmul.f32 %v1727, %v1381
  %v1732 = vmul.f32 %v1728, %v1254
  %v1733 = vmul.f32 %v1729, %v1384
  %v1734 = vadd.f32 %v1730, %v1732
  %v1735 = vrot.slane %v1734, 4
  %v1736 = vadd.f32 %v1734, %v1735
  %v1737 = vrot.slane %v1736, 2
  %v1738 = vadd.f32 %v1736, %v1737
  %v1739 = vrot.slane %v1738, 1
  %v1740 = vadd.f32 %v1738, %v1739
  %v1741 = vadd.f32 %v1731, %v1733
  %v1742 = vrot.slane %v1741, 4
  %v1743 = vadd.f32 %v1741, %v1742
  %v1744 = vrot.slane %v1743, 2
  %v1745 = vadd.f32 %v1743, %v1744
  %v1746 = vrot.slane %v1745, 1
  %v1747 = vadd.f32 %v1745, %v1746
  %v1748 = vmul.f32 %v1529, %v1726
  %v1749 = vmul.f32 %v1531, %v1727
  %v1750 = vmul.f32 %v1533, %v1728
  %v1751 = vmul.f32 %v1535, %v1729
  %v1752 = vadd.f32 %v1748, %v1628
  %v1753 = vadd.f32 %v1749, %v1629
  %v1754 = vadd.f32 %v1750, %v1630
  %v1755 = vadd.f32 %v1751, %v1631
  %v1756 = vmul.f32 %v1752, %v1257
  %v1757 = vmul.f32 %v1753, %v1387
  %v1758 = vmul.f32 %v1754, %v1260
  %v1759 = vmul.f32 %v1755, %v1390
  %v1760 = vadd.f32 %v1756, %v1758
  %v1761 = vrot.slane %v1760, 4
  %v1762 = vadd.f32 %v1760, %v1761
  %v1763 = vrot.slane %v1762, 2
  %v1764 = vadd.f32 %v1762, %v1763
  %v1765 = vrot.slane %v1764, 1
  %v1766 = vadd.f32 %v1764, %v1765
  %v1767 = vadd.f32 %v1757, %v1759
  %v1768 = vrot.slane %v1767, 4
  %v1769 = vadd.f32 %v1767, %v1768
  %v1770 = vrot.slane %v1769, 2
  %v1771 = vadd.f32 %v1769, %v1770
  %v1772 = vrot.slane %v1771, 1
  %v1773 = vadd.f32 %v1771, %v1772
  %v1774 = vmul.f32 %v1537, %v1752
  %v1775 = vmul.f32 %v1539, %v1753
  %v1776 = vmul.f32 %v1541, %v1754
  %v1777 = vmul.f32 %v1543, %v1755
  %v1778 = vadd.f32 %v1774, %v1632
  %v1779 = vadd.f32 %v1775, %v1633
  %v1780 = vadd.f32 %v1776, %v1634
  %v1781 = vadd.f32 %v1777, %v1635
  %v1782 = vmul.f32 %v1778, %v1263
  %v1783 = vmul.f32 %v1779, %v1393
  %v1784 = vmul.f32 %v1780, %v1266
  %v1785 = vmul.f32 %v1781, %v1396
  %v1786 = vadd.f32 %v1782, %v1784
  %v1787 = vrot.slane %v1786, 4
  %v1788 = vadd.f32 %v1786, %v1787
  %v1789 = vrot.slane %v1788, 2
  %v1790 = vadd.f32 %v1788, %v1789
  %v1791 = vrot.slane %v1790, 1
  %v1792 = vadd.f32 %v1790, %v1791
  %v1793 = vadd.f32 %v1783, %v1785
  %v1794 = vrot.slane %v1793, 4
  %v1795 = vadd.f32 %v1793, %v1794
  %v1796 = vrot.slane %v1795, 2
  %v1797 = vadd.f32 %v1795, %v1796
  %v1798 = vrot.slane %v1797, 1
  %v1799 = vadd.f32 %v1797, %v1798
  %v1800 = vmul.f32 %v1545, %v1778
  %v1801 = vmul.f32 %v1547, %v1779
  %v1802 = vmul.f32 %v1549, %v1780
  %v1803 = vmul.f32 %v1551, %v1781
  %v1804 = vadd.f32 %v1800, %v1636
  %v1805 = vadd.f32 %v1801, %v1637
  %v1806 = vadd.f32 %v1802, %v1638
  %v1807 = vadd.f32 %v1803, %v1639
  %v1808 = vmul.f32 %v1804, %v1269
  %v1809 = vmul.f32 %v1805, %v1399
  %v1810 = vmul.f32 %v1806, %v1272
  %v1811 = vmul.f32 %v1807, %v1402
  %v1812 = vadd.f32 %v1808, %v1810
  %v1813 = vrot.slane %v1812, 4
  %v1814 = vadd.f32 %v1812, %v1813
  %v1815 = vrot.slane %v1814, 2
  %v1816 = vadd.f32 %v1814, %v1815
  %v1817 = vrot.slane %v1816, 1
  %v1818 = vadd.f32 %v1816, %v1817
  %v1819 = vadd.f32 %v1809, %v1811
  %v1820 = vrot.slane %v1819, 4
  %v1821 = vadd.f32 %v1819, %v1820
  %v1822 = vrot.slane %v1821, 2
  %v1823 = vadd.f32 %v1821, %v1822
  %v1824 = vrot.slane %v1823, 1
  %v1825 = vadd.f32 %v1823, %v1824
  %v1826 = vmul.f32 %v1553, %v1804
  %v1827 = vmul.f32 %v1555, %v1805
  %v1828 = vmul.f32 %v1557, %v1806
  %v1829 = vmul.f32 %v1559, %v1807
  %v1830 = vadd.f32 %v1826, %v1640
  %v1831 = vadd.f32 %v1827, %v1641
  %v1832 = vadd.f32 %v1828, %v1642
  %v1833 = vadd.f32 %v1829, %v1643
  %v1834 = vmul.f32 %v1830, %v1275
  %v1835 = vmul.f32 %v1831, %v1405
  %v1836 = vmul.f32 %v1832, %v1278
  %v1837 = vmul.f32 %v1833, %v1408
  %v1838 = vadd.f32 %v1834, %v1836
  %v1839 = vrot.slane %v1838, 4
  %v1840 = vadd.f32 %v1838, %v1839
  %v1841 = vrot.slane %v1840, 2
  %v1842 = vadd.f32 %v1840, %v1841
  %v1843 = vrot.slane %v1842, 1
  %v1844 = vadd.f32 %v1842, %v1843
  %v1845 = vadd.f32 %v1835, %v1837
  %v1846 = vrot.slane %v1845, 4
  %v1847 = vadd.f32 %v1845, %v1846
  %v1848 = vrot.slane %v1847, 2
  %v1849 = vadd.f32 %v1847, %v1848
  %v1850 = vrot.slane %v1849, 1
  %v1851 = vadd.f32 %v1849, %v1850
  %v1852 = vsel %vm700, %v1662, %v1688
  %v1853 = vsel %vm700, %v1669, %v1695
  %vm1854 = vcmask 1041408
  %v1855 = vsel %vm1854, %v1852, %v1714
  %v1856 = vsel %vm1854, %v1853, %v1721
  %v1857 = vsel %vm296, %v1855, %v1740
  %v1858 = vsel %vm296, %v1856, %v1747
  %vm1859 = vcmask 1043456
  %v1860 = vsel %vm1859, %v1857, %v1766
  %v1861 = vsel %vm1859, %v1858, %v1773
  %v1862 = vsel %vm380, %v1860, %v1792
  %v1863 = vsel %vm380, %v1861, %v1799
  %v1864 = vsel %vm355, %v1862, %v1818
  %v1865 = vsel %vm355, %v1863, %v1825
  %v1866 = vsel %vm330, %v1864, %v1844
  %v1867 = vsel %vm330, %v1865, %v1851
  %v1868 = vld [vmem:[%s11] sm:$0x3]
  %v1870 = vperm.slane %v1868, 0
  %v1871 = vperm.slane %v1868, 1
  %v1874 = vmul.f32 %v1870, %v413
  %v1875 = vmul.f32 %v1871, %v428
  %v1876 = vadd.f32 %v1866, %v1874
  %v1877 = vadd.f32 %v1867, %v1875
  %v1878 = vsub.f32 0.0, %v273
  %v1879 = vsub.f32 0.0, %v286
  %v1880 = vmul.f32 %v1878, 1.442695
  %v1881 = vpow.pop %v1880
  %v1882 = vmul.f32 %v1879, 1.442695
  %v1883 = vpow.pop %v1882
  %v1884 = vadd.f32 %v1881, 1.0
  %v1885 = vadd.f32 %v1883, 1.0
  %v1886 = vrcp.pop %v1884
  %v1887 = vmul.f32 %v1884, %v1886
  %v1888 = vsub.f32 1.0, %v1887
  %v1889 = vmul.f32 %v1886, %v1888
  %v1890 = vadd.f32 %v1886, %v1889
  %vm1891 = vweird.f32 %v1884
  %vm1892 = vweird.f32 %v1886
  %vm1893 = vmor %vm1891, %vm1892
  %v1894 = vsel %vm1893, %v1886, %v1890
  %v1895 = vand.u32 2147483647, %v1884
  %vm1896 = vcmp.eq.f32.partialorder %v1895, 8.507059e+37
  %v1897 = vand.u32 %v1884, 2147483648
  %v1898 = vor.u32 1.1754944e-38, %v1897
  %v1899 = vsel %vm1896, %v1898, %v1894
  %v1900 = vmul.f32 %v273, %v1899
  %v1901 = vrcp.pop %v1885
  %v1902 = vmul.f32 %v1885, %v1901
  %v1903 = vsub.f32 1.0, %v1902
  %v1904 = vmul.f32 %v1901, %v1903
  %v1905 = vadd.f32 %v1901, %v1904
  %vm1906 = vweird.f32 %v1885
  %vm1907 = vweird.f32 %v1901
  %vm1908 = vmor %vm1906, %vm1907
  %v1909 = vsel %vm1908, %v1901, %v1905
  %v1910 = vand.u32 2147483647, %v1885
  %vm1911 = vcmp.eq.f32.partialorder %v1910, 8.507059e+37
  %v1912 = vand.u32 %v1885, 2147483648
  %v1913 = vor.u32 1.1754944e-38, %v1912
  %v1914 = vsel %vm1911, %v1913, %v1909
  %v1915 = vmul.f32 %v286, %v1914
  %v1916 = vmul.f32 %v1876, %v1900
  %v1917 = vmul.f32 %v1877, %v1915
  %v1918 = vpack.c.bf16 %v1916, %v1916
  %v1919 = vpack.c.bf16 %v1917, %v1917
  %v1920 = vld [vmem:[%s12] sm:$0xf]
  %v1921 = vld [vmem:[%s12 + $0x4] sm:$0xf]
  %v1922 = vld [vmem:[%s12 + $0x8] sm:$0xf]
  %v1923 = vld [vmem:[%s12 + $0xc] sm:$0xf]
  %v1924 = vld [vmem:[%s12 + $0x10] sm:$0xf]
  %v1925 = vld [vmem:[%s12 + $0x14] sm:$0xf]
  %v1926 = vld [vmem:[%s12 + $0x18] sm:$0xf]
  %v1927 = vld [vmem:[%s12 + $0x1c] sm:$0xf]
  %v1928 = vld [vmem:[%s12 + $0x20] sm:$0xf]
  %v1929 = vld [vmem:[%s12 + $0x24] sm:$0xf]
  %v1930 = vld [vmem:[%s12 + $0x28] sm:$0xf]
  %v1931 = vld [vmem:[%s12 + $0x2c] sm:$0xf]
  %v1932 = vld [vmem:[%s12 + $0x30] sm:$0xf]
  %v1933 = vld [vmem:[%s12 + $0x34] sm:$0xf]
  %v1934 = vld [vmem:[%s12 + $0x38] sm:$0xf]
  %v1935 = vld [vmem:[%s12 + $0x3c] sm:$0xf]
  %v1936 = vld [vmem:[%s12 + $0x40] sm:$0xf]
  %v1937 = vld [vmem:[%s12 + $0x44] sm:$0xf]
  %v1938 = vld [vmem:[%s12 + $0x48] sm:$0xf]
  %v1939 = vld [vmem:[%s12 + $0x4c] sm:$0xf]
  %v1940 = vld [vmem:[%s12 + $0x50] sm:$0xf]
  %v1941 = vld [vmem:[%s12 + $0x54] sm:$0xf]
  %v1942 = vld [vmem:[%s12 + $0x58] sm:$0xf]
  %v1943 = vld [vmem:[%s12 + $0x5c] sm:$0xf]
  %v1944 = vld [vmem:[%s12 + $0x60] sm:$0xf]
  %v1945 = vld [vmem:[%s12 + $0x64] sm:$0xf]
  %v1946 = vld [vmem:[%s12 + $0x68] sm:$0xf]
  %v1947 = vld [vmem:[%s12 + $0x6c] sm:$0xf]
  %v1948 = vld [vmem:[%s12 + $0x70] sm:$0xf]
  %v1949 = vld [vmem:[%s12 + $0x74] sm:$0xf]
  %v1950 = vld [vmem:[%s12 + $0x78] sm:$0xf]
  %v1951 = vld [vmem:[%s12 + $0x7c] sm:$0xf]
  %v1984 = vunpack.c.l.b16 %v1920
  %v1985 = vunpack.c.l.b16 %v1921
  %v1986 = vunpack.c.l.b16 %v1922
  %v1987 = vunpack.c.l.b16 %v1923
  %v1988 = vunpack.c.l.b16 %v1924
  %v1989 = vunpack.c.l.b16 %v1925
  %v1990 = vunpack.c.l.b16 %v1926
  %v1991 = vunpack.c.l.b16 %v1927
  %v1992 = vunpack.c.l.b16 %v1928
  %v1993 = vunpack.c.l.b16 %v1929
  %v1994 = vunpack.c.l.b16 %v1930
  %v1995 = vunpack.c.l.b16 %v1931
  %v1996 = vunpack.c.l.b16 %v1932
  %v1997 = vunpack.c.l.b16 %v1933
  %v1998 = vunpack.c.l.b16 %v1934
  %v1999 = vunpack.c.l.b16 %v1935
  %v2000 = vunpack.c.l.b16 %v1936
  %v2001 = vunpack.c.l.b16 %v1937
  %v2002 = vunpack.c.l.b16 %v1938
  %v2003 = vunpack.c.l.b16 %v1939
  %v2004 = vunpack.c.l.b16 %v1940
  %v2005 = vunpack.c.l.b16 %v1941
  %v2006 = vunpack.c.l.b16 %v1942
  %v2007 = vunpack.c.l.b16 %v1943
  %v2008 = vunpack.c.l.b16 %v1944
  %v2009 = vunpack.c.l.b16 %v1945
  %v2010 = vunpack.c.l.b16 %v1946
  %v2011 = vunpack.c.l.b16 %v1947
  %v2012 = vunpack.c.l.b16 %v1948
  %v2013 = vunpack.c.l.b16 %v1949
  %v2014 = vunpack.c.l.b16 %v1950
  %v2015 = vunpack.c.l.b16 %v1951
  %v2016 = vpack.c.b16 %v1985, %v1984
  %v2017 = vpack.c.b16 %v1987, %v1986
  %v2018 = vpack.c.b16 %v1989, %v1988
  %v2019 = vpack.c.b16 %v1991, %v1990
  %v2020 = vpack.c.b16 %v1993, %v1992
  %v2021 = vpack.c.b16 %v1995, %v1994
  %v2022 = vpack.c.b16 %v1997, %v1996
  %v2023 = vpack.c.b16 %v1999, %v1998
  %v2024 = vpack.c.b16 %v2001, %v2000
  %v2025 = vpack.c.b16 %v2003, %v2002
  %v2026 = vpack.c.b16 %v2005, %v2004
  %v2027 = vpack.c.b16 %v2007, %v2006
  %v2028 = vpack.c.b16 %v2009, %v2008
  %v2029 = vpack.c.b16 %v2011, %v2010
  %v2030 = vpack.c.b16 %v2013, %v2012
  %v2031 = vpack.c.b16 %v2015, %v2014
  %2048 = vmatpush.bf16.msra.mxu0 %v2023
  %2049 = vmatpush.bf16.msra.mxu0 %v2022
  %2050 = vmatpush.bf16.msra.mxu0 %v2021
  %2051 = vmatpush.bf16.msra.mxu0 %v2020
  %2052 = vmatpush.bf16.msra.mxu0 %v2019
  %2053 = vmatpush.bf16.msra.mxu0 %v2018
  %2054 = vmatpush.bf16.msra.mxu0 %v2017
  %2055 = vmatpush.bf16.msra.mxu0 %v2016
  %2056 = vmatmul.bf16.gmra.mxu0 %v1918
  %v2057 = vpop.f32.mrf.mxu0
  %v2058 = vadd.f32 0.0, %v2057
  %v2059 = vpop.f32.mrf.mxu0
  %2060 = vdwg.mxu0
  %2061 = vmatpush.bf16.msra.mxu0 %v2031
  %2062 = vmatpush.bf16.msra.mxu0 %v2030
  %2063 = vmatpush.bf16.msra.mxu0 %v2029
  %2064 = vmatpush.bf16.msra.mxu0 %v2028
  %2065 = vmatpush.bf16.msra.mxu0 %v2027
  %2066 = vmatpush.bf16.msra.mxu0 %v2026
  %2067 = vmatpush.bf16.msra.mxu0 %v2025
  %2068 = vmatpush.bf16.msra.mxu0 %v2024
  %2069 = vmatmul.bf16.gmra.mxu0 %v1919
  %v2070 = vpop.f32.mrf.mxu0
  %v2071 = vadd.f32 %v2058, %v2070
  %v2072 = vpop.f32.mrf.mxu0
  %2073 = vdwg.mxu0
  %v2074 = vpack.c.bf16 %v2071, %v2071
  %2075 = vst [vmem:[%s13] sm:$0xf] %v2074
  // Predicated region
  $region54: #{mamba_language_model.2} parent=0 // pred_check
    _
  $region55: #{mamba_language_model.2} parent=0 // pred_check_branch
    %2077 = sbr.rel (0) target = $region57
  $region56: #{mamba_language_model.2} parent=0 // pred_region
    _
  $region57: #{mamba_language_model.2} parent=0 // pred_fallthru
    _
  // Predicated region
  $region58: #{mamba_language_model.2} parent=0 // pred_check
    _
  $region59: #{mamba_language_model.2} parent=0 // pred_check_branch
    %2079 = sbr.rel (0) target = $region61
  $region60: #{mamba_language_model.2} parent=0 // pred_region
    _
  $region61: #{mamba_language_model.2} parent=0 // pred_fallthru
    _

</llo_original>
